<compile_context>
chip_gen: v7x
topology: tpu7x:2x2x1
jax: 0.10.0
libtpu: 0.0.40
codegen_flags: <defaults>
</compile_context>

<pallas_src>
import math
import functools

import jax
import jax.numpy as jnp
from jax.experimental import pallas as pl
from jax.experimental.pallas import tpu as pltpu


# Safe on every generation: v5e/v6e have 128 MiB VMEM, v7x has 64 MiB.
_VMEM_LIMIT_BYTES = 48 * 1024 * 1024


def _pick_tile(dim, preferred, align):
    """Largest tile <= `preferred` that divides `dim` and is a multiple of
    `align`; falls back to the full dimension (always a legal block size)."""
    if dim <= preferred:
        return dim
    t = preferred
    while t >= align:
        if dim % t == 0:
            return t
        t //= 2
    return dim


# --------------------------------------------------------------------------
# Kernel 1: fused dense projections  y_g = x @ W_g + b_g  (shared input x)
# --------------------------------------------------------------------------
def _fused_linear_kernel(x_ref, *refs, n):
    w_refs = refs[0:n]
    b_refs = refs[n:2 * n]
    o_refs = refs[2 * n:3 * n]
    acc_refs = refs[3 * n:4 * n]

    @pl.when(pl.program_id(2) == 0)
    def _init():
        for acc in acc_refs:
            acc[...] = jnp.zeros(acc.shape, acc.dtype)

    x = x_ref[...]                         # x block loaded once, reused n times
    for w, acc in zip(w_refs, acc_refs):
        acc[...] += jnp.dot(x, w[...], preferred_element_type=jnp.float32)

    @pl.when(pl.program_id(2) == pl.num_programs(2) - 1)
    def _finalize():
        for b, o, acc in zip(b_refs, o_refs, acc_refs):
            o[...] = (acc[...] + b[...]).astype(o.dtype)


def fused_linear(x, ws, bs, *, tm=256, tn=256, tk=512):
    """x: (M, K); ws: tuple of (K, N) weights; bs: tuple of (N,) biases.

    Returns a tuple of len(ws) arrays of shape (M, N) in x.dtype."""
    n = len(ws)
    assert n == len(bs) and n >= 1
    M, K = x.shape
    K2, N = ws[0].shape
    assert K == K2
    tm = _pick_tile(M, tm, 8)
    tn = _pick_tile(N, tn, 128)
    tk = _pick_tile(K, tk, 128)
    grid = (M // tm, N // tn, K // tk)

    itemsize = jnp.dtype(x.dtype).itemsize
    cost = pl.CostEstimate(
        flops=2 * M * N * K * n,
        transcendentals=0,
        bytes_accessed=(M * K + n * K * N + n * M * N) * itemsize + n * N * 4)

    in_specs = [pl.BlockSpec((tm, tk), lambda i, j, k: (i, k))]
    in_specs += [pl.BlockSpec((tk, tn), lambda i, j, k: (k, j))] * n
    in_specs += [pl.BlockSpec((1, tn), lambda i, j, k: (0, j))] * n
    out_specs = [pl.BlockSpec((tm, tn), lambda i, j, k: (i, j))] * n

    kernel = functools.partial(_fused_linear_kernel, n=n)
    outs = pl.pallas_call(
        kernel,
        out_shape=tuple(jax.ShapeDtypeStruct((M, N), x.dtype) for _ in range(n)),
        grid_spec=pltpu.PrefetchScalarGridSpec(
            num_scalar_prefetch=0,
            grid=grid,
            in_specs=in_specs,
            out_specs=out_specs,
            scratch_shapes=[pltpu.VMEM((tm, tn), jnp.float32)] * n,
        ),
        compiler_params=pltpu.CompilerParams(
            dimension_semantics=("parallel", "parallel", "arbitrary"),
            vmem_limit_bytes=_VMEM_LIMIT_BYTES),
        cost_estimate=cost,
    )(x, *ws, *[b.reshape(1, N).astype(jnp.float32) for b in bs])
    return outs


def linear(x, w, b, **kw):
    return fused_linear(x, (w,), (b,), **kw)[0]


# --------------------------------------------------------------------------
# Kernel 2: flash-style attention on (B, S, d_model), heads = column groups
# --------------------------------------------------------------------------
def _flash_attention_kernel(q_ref, k_ref, v_ref, mask_ref, o_ref,
                            m_sc, l_sc, acc_sc, *, h, scale):
    kv_idx = pl.program_id(2)

    @pl.when(kv_idx == 0)
    def _init():
        m_sc[...] = jnp.full(m_sc.shape, -jnp.inf, m_sc.dtype)
        l_sc[...] = jnp.zeros(l_sc.shape, l_sc.dtype)
        acc_sc[...] = jnp.zeros(acc_sc.shape, acc_sc.dtype)

    d_model = q_ref.shape[-1]
    d_k = d_model // h
    compute_dtype = q_ref.dtype

    # Key-position mask for this KV tile: True => masked out.  Broadcasts
    # over query rows (matches mask.unsqueeze(-2) == 0 in the reference).
    key_masked = mask_ref[0] == 0.0                       # (1, tkv)

    for hh in range(h):                                   # h is static -> unrolled
        sl = slice(hh * d_k, (hh + 1) * d_k)
        q = q_ref[0, :, sl] * scale                       # pre-scale q (tq*d_k muls)
        k = k_ref[0, :, sl]
        v = v_ref[0, :, sl]

        # (tq, tkv) = q @ k.T on the MXU with fp32 accumulation.
        s = jax.lax.dot_general(q, k, (((1,), (1,)), ((), ())),
                                preferred_element_type=jnp.float32)
        s = jnp.where(key_masked, jnp.float32(-1e9), s)

        m_prev = m_sc[hh]                                 # (tq, 1)
        m_new = jnp.maximum(m_prev, jnp.max(s, axis=-1, keepdims=True))
        alpha = jnp.exp(m_prev - m_new)                   # (tq, 1)
        p = jnp.exp(s - m_new)                            # (tq, tkv), fp32
        l_sc[hh] = alpha * l_sc[hh] + jnp.sum(p, axis=-1, keepdims=True)
        pv = jax.lax.dot_general(p.astype(compute_dtype), v,
                                 (((1,), (0,)), ((), ())),
                                 preferred_element_type=jnp.float32)
        acc_sc[hh] = alpha * acc_sc[hh] + pv              # (tq, d_k), fp32
        m_sc[hh] = m_new

    @pl.when(kv_idx == pl.num_programs(2) - 1)
    def _finalize():
        outs = []
        for hh in range(h):
            inv_l = pl.reciprocal(l_sc[hh], approx=False)
            outs.append(acc_sc[hh] * inv_l)
        # Single lane-dense store of the full (tq, d_model) row block.
        o_ref[0] = jnp.concatenate(outs, axis=-1).astype(o_ref.dtype)


def scaled_dot_product_attention(q, k, v, mask, *, h, tq=128, tkv=256):
    """q: (B,Sq,d_model), k/v: (B,Skv,d_model), mask: (B,Skv) (0 => masked)."""
    B, Sq, d_model = q.shape
    _, Skv, _ = k.shape
    assert d_model % h == 0
    d_k = d_model // h

    tq = _pick_tile(Sq, tq, 8)
    tkv = _pick_tile(Skv, tkv, 128)   # mask's lane dim: multiple of 128 or full
    grid = (B, Sq // tq, Skv // tkv)

    if mask is None:
        mask = jnp.ones((B, Skv), jnp.float32)
    mask3 = mask.reshape(B, 1, Skv).astype(jnp.float32)
    # TODO(synk): scalar-prefetch per-tile "any unmasked?" flags to pl.when-skip
    # fully masked KV tiles for long, heavily padded sequences.

    itemsize = jnp.dtype(q.dtype).itemsize
    cost = pl.CostEstimate(
        flops=4 * B * Sq * Skv * d_model,
        transcendentals=B * h * Sq * Skv,
        bytes_accessed=(2 * B * Sq * d_model + 2 * B * Skv * d_model) * itemsize
                       + B * Skv * 4)

    kernel = functools.partial(_flash_attention_kernel, h=h,
                               scale=1.0 / math.sqrt(d_k))

    return pl.pallas_call(
        kernel,
        out_shape=jax.ShapeDtypeStruct((B, Sq, d_model), q.dtype),
        grid_spec=pltpu.PrefetchScalarGridSpec(
            num_scalar_prefetch=0,
            grid=grid,
            in_specs=[
                pl.BlockSpec((1, tq, d_model), lambda b, qi, kj: (b, qi, 0)),
                pl.BlockSpec((1, tkv, d_model), lambda b, qi, kj: (b, kj, 0)),
                pl.BlockSpec((1, tkv, d_model), lambda b, qi, kj: (b, kj, 0)),
                pl.BlockSpec((1, 1, tkv), lambda b, qi, kj: (b, 0, kj)),
            ],
            out_specs=pl.BlockSpec((1, tq, d_model), lambda b, qi, kj: (b, qi, 0)),
            scratch_shapes=[
                pltpu.VMEM((h, tq, 1), jnp.float32),     # running max  m
                pltpu.VMEM((h, tq, 1), jnp.float32),     # running sum  l
                pltpu.VMEM((h, tq, d_k), jnp.float32),   # output accumulator
            ],
        ),
        compiler_params=pltpu.CompilerParams(
            dimension_semantics=("parallel", "parallel", "arbitrary"),
            vmem_limit_bytes=_VMEM_LIMIT_BYTES),
        cost_estimate=cost,
    )(q, k, v, mask3)


# --------------------------------------------------------------------------
# MultiHeadedAttention forward (no HBM transposes; all compute in Pallas)
# --------------------------------------------------------------------------
def init_params(key, d_model):
    """Synthetic init; weights stored already-transposed as (d_in, d_out)."""
    ks = jax.random.split(key, 8)
    scale = 1.0 / math.sqrt(d_model)
    params = {}
    for i, n in enumerate(["q", "k", "v", "o"]):
        params["w" + n] = jax.random.uniform(
            ks[2 * i], (d_model, d_model), jnp.float32, minval=-scale, maxval=scale)
        params["b" + n] = jax.random.uniform(
            ks[2 * i + 1], (d_model,), jnp.float32, minval=-scale, maxval=scale)
    return params


@functools.partial(jax.jit, static_argnames=("h",))
def _mha_self_attention(x, mask, params, *, h):
    """Self-attention fast path: Q/K/V projections fused into ONE kernel so
    the input activations are read from HBM once instead of three times."""
    B, S, d_model = x.shape
    xf = x.reshape(B * S, d_model)
    q, k, v = fused_linear(
        xf,
        (params["wq"], params["wk"], params["wv"]),
        (params["bq"], params["bk"], params["bv"]))
    ctx = scaled_dot_product_attention(
        q.reshape(B, S, d_model), k.reshape(B, S, d_model),
        v.reshape(B, S, d_model), mask, h=h)
    out = linear(ctx.reshape(B * S, d_model), params["wo"], params["bo"])
    return out.reshape(B, S, d_model)


@functools.partial(jax.jit, static_argnames=("h",))
def _mha_general(query, key, value, mask, params, *, h):
    """General path (distinct query/key/value tensors)."""
    B, Sq, d_model = query.shape
    _, Skv, _ = key.shape
    q = linear(query.reshape(B * Sq, d_model), params["wq"], params["bq"])
    k = linear(key.reshape(B * Skv, d_model), params["wk"], params["bk"])
    v = linear(value.reshape(B * Skv, d_model), params["wv"], params["bv"])
    ctx = scaled_dot_product_attention(
        q.reshape(B, Sq, d_model), k.reshape(B, Skv, d_model),
        v.reshape(B, Skv, d_model), mask, h=h)
    out = linear(ctx.reshape(B * Sq, d_model), params["wo"], params["bo"])
    return out.reshape(B, Sq, d_model)


def multi_headed_attention(query, key, value, mask, params, *, h):
    """query/key/value: (B, S, d_model); mask: (B, S_kv), 0 => masked key.

    Heads stay as contiguous column groups of the projected activations, so
    the .view(...).transpose(1,2) / .transpose(1,2).contiguous() round trips
    of the PyTorch module never touch HBM here."""
    assert query.shape[-1] % h == 0
    if (query is key) and (key is value):
        return _mha_self_attention(query, mask, params, h=h)
    return _mha_general(query, key, value, mask, params, h=h)


# --------------------------------------------------------------------------
# Pure-JAX fp32 reference (mirrors the PyTorch module exactly)
# --------------------------------------------------------------------------
def reference(query, key, value, mask, params, h):
    B, S, d_model = query.shape
    d_k = d_model // h

    def proj(x, w, b):
        return (x @ w + b).reshape(B, S, h, d_k).transpose(0, 2, 1, 3)

    q = proj(query, params["wq"], params["bq"])
    k = proj(key, params["wk"], params["bk"])
    v = proj(value, params["wv"], params["bv"])
    scores = jnp.einsum("bhqd,bhkd->bhqk", q, k) / math.sqrt(d_k)
    scores = jnp.where(mask.reshape(B, 1, 1, S) == 0, -1e9, scores)
    p = jax.nn.softmax(scores, axis=-1)
    ctx = jnp.einsum("bhqk,bhkd->bhqd", p, v)
    x = ctx.transpose(0, 2, 1, 3).reshape(B, S, d_model)
    return x @ params["wo"] + params["bo"]


if __name__ == "__main__":
    B, S, h, d_model = 2, 8, 4, 32

    key0 = jax.random.PRNGKey(0)
    kq, kk, kv, kp = jax.random.split(key0, 4)
    query = jax.random.normal(kq, (B, S, d_model), jnp.float32)
    key_in = jax.random.normal(kk, (B, S, d_model), jnp.float32)
    value = jax.random.normal(kv, (B, S, d_model), jnp.float32)

    # mask: (B, S), 1 = attend, 0 = masked (last two keys of batch 1 masked)
    mask = jnp.ones((B, S), jnp.float32).at[1, -2:].set(0.0)

    params = init_params(kp, d_model)

    # ---- fp32 general path (distinct q/k/v): exact parity -----------------
    ref = reference(query, key_in, value, mask, params, h)
    out = multi_headed_attention(query, key_in, value, mask, params, h=h)
    out = jax.block_until_ready(out)
    assert out.shape == (B, S, d_model)
    err = float(jnp.max(jnp.abs(out - ref)))
    assert err < 2e-4, f"fp32 general mismatch vs reference: {err}"

    # ---- fp32 self-attention fast path (fused QKV projection) -------------
    ref_self = reference(query, query, query, mask, params, h)
    out_self = multi_headed_attention(query, query, query, mask, params, h=h)
    out_self = jax.block_until_ready(out_self)
    err_self = float(jnp.max(jnp.abs(out_self - ref_self)))
    assert err_self < 2e-4, f"fp32 self-attention mismatch vs reference: {err_self}"

    # ---- bf16 MXU path (fp32 accumulation / fp32 softmax statistics) ------
    params_bf16 = {n: (p.astype(jnp.bfloat16) if n.startswith("w") else p)
                   for n, p in params.items()}
    out_bf16 = multi_headed_attention(
        query.astype(jnp.bfloat16), key_in.astype(jnp.bfloat16),
        value.astype(jnp.bfloat16), mask, params_bf16, h=h)
    out_bf16 = jax.block_until_ready(out_bf16).astype(jnp.float32)
    err16 = float(jnp.max(jnp.abs(out_bf16 - ref)))
    assert err16 < 1e-1, f"bf16 mismatch vs fp32 reference: {err16}"

    print("KERNEL_OK")
</pallas_src>

<mosaic_0001>
module attributes {stable_mosaic.version = 11 : i64} {
  func.func @_fused_linear_kernel(%arg0: i32, %arg1: i32, %arg2: i32, %arg3: memref<16x32xf32, #tpu.memory_space<vmem>>, %arg4: memref<32x32xf32, #tpu.memory_space<vmem>>, %arg5: memref<1x32xf32, #tpu.memory_space<vmem>>, %arg6: memref<16x32xf32, #tpu.memory_space<vmem>>, %arg7: memref<16x32xf32, #tpu.memory_space<vmem>>) attributes {dimension_semantics = [#tpu.dimension_semantics<parallel>, #tpu.dimension_semantics<parallel>, #tpu.dimension_semantics<arbitrary>], iteration_bounds = array<i64: 1, 1, 1>, scalar_prefetch = 0 : i64, scratch_operands = 1 : i64, tpu.core_type = #tpu.core_type<tc>, window_params = [{transform_indices = @transform_0, window_bounds = array<i64: 16, 32>}, {transform_indices = @transform_1, window_bounds = array<i64: 32, 32>}, {transform_indices = @transform_2, window_bounds = array<i64: 1, 32>}, {transform_indices = @transform_3, window_bounds = array<i64: 16, 32>}]} {
    %c0_i32 = arith.constant 0 : i32
    %0 = arith.cmpi eq, %arg2, %c0_i32 : i32
    %1 = arith.extui %0 : i1 to i32
    %c0_i32_0 = arith.constant 0 : i32
    %2 = arith.cmpi ne, %1, %c0_i32_0 : i32
    scf.if %2 {
      %cst_10 = arith.constant 0.000000e+00 : f32
      %12 = vector.broadcast %cst_10 : f32 to vector<16x32xf32>
      %c0_11 = arith.constant 0 : index
      %c0_12 = arith.constant 0 : index
      %13 = vector.load %arg7[%c0_11, %c0_12] : memref<16x32xf32, #tpu.memory_space<vmem>>, vector<16x32xf32>
      tpu.vector_store %arg7[%c0_11, %c0_12], %12 {strides = array<i32>} : memref<16x32xf32, #tpu.memory_space<vmem>>, vector<16x32xf32>,
    } else {
    }
    %c0 = arith.constant 0 : index
    %c0_1 = arith.constant 0 : index
    %3 = vector.load %arg3[%c0, %c0_1] : memref<16x32xf32, #tpu.memory_space<vmem>>, vector<16x32xf32>
    %c0_2 = arith.constant 0 : index
    %c0_3 = arith.constant 0 : index
    %4 = vector.load %arg7[%c0_2, %c0_3] : memref<16x32xf32, #tpu.memory_space<vmem>>, vector<16x32xf32>
    %c0_4 = arith.constant 0 : index
    %c0_5 = arith.constant 0 : index
    %5 = vector.load %arg4[%c0_4, %c0_5] : memref<32x32xf32, #tpu.memory_space<vmem>>, vector<32x32xf32>
    %cst = arith.constant dense<0.000000e+00> : vector<16x32xf32>
    %6 = tpu.matmul %3, %5, %cst {dimension_numbers = #tpu.dot_dimension_numbers<[1], [0], [0], [1], [0, 0, 1, 1], [], []>} : vector<16x32xf32>, vector<32x32xf32>, vector<16x32xf32> -> vector<16x32xf32>
    %7 = arith.addf %4, %6 : vector<16x32xf32>
    %c0_6 = arith.constant 0 : index
    %c0_7 = arith.constant 0 : index
    %8 = vector.load %arg7[%c0_6, %c0_7] : memref<16x32xf32, #tpu.memory_space<vmem>>, vector<16x32xf32>
    tpu.vector_store %arg7[%c0_6, %c0_7], %7 {strides = array<i32>} : memref<16x32xf32, #tpu.memory_space<vmem>>, vector<16x32xf32>,
    %c0_i32_8 = arith.constant 0 : i32
    %9 = arith.cmpi eq, %arg2, %c0_i32_8 : i32
    %10 = arith.extui %9 : i1 to i32
    %c0_i32_9 = arith.constant 0 : i32
    %11 = arith.cmpi ne, %10, %c0_i32_9 : i32
    scf.if %11 {
      %c0_10 = arith.constant 0 : index
      %c0_11 = arith.constant 0 : index
      %12 = vector.load %arg7[%c0_10, %c0_11] : memref<16x32xf32, #tpu.memory_space<vmem>>, vector<16x32xf32>
      %c0_12 = arith.constant 0 : index
      %c0_13 = arith.constant 0 : index
      %13 = vector.load %arg5[%c0_12, %c0_13] : memref<1x32xf32, #tpu.memory_space<vmem>>, vector<1x32xf32>
      %14 = vector.broadcast %13 : vector<1x32xf32> to vector<16x32xf32>
      %15 = arith.addf %12, %14 : vector<16x32xf32>
      %c0_14 = arith.constant 0 : index
      %c0_15 = arith.constant 0 : index
      %16 = vector.load %arg6[%c0_14, %c0_15] : memref<16x32xf32, #tpu.memory_space<vmem>>, vector<16x32xf32>
      tpu.vector_store %arg6[%c0_14, %c0_15], %15 {strides = array<i32>} : memref<16x32xf32, #tpu.memory_space<vmem>>, vector<16x32xf32>,
    } else {
    }
    return
  }
  func.func @transform_0(%arg0: i32, %arg1: i32, %arg2: i32) -> (i32, i32) {
    %c0_i32 = arith.constant 0 : i32
    return %arg0, %arg2 : i32, i32
  }
  func.func @transform_1(%arg0: i32, %arg1: i32, %arg2: i32) -> (i32, i32) {
    %c0_i32 = arith.constant 0 : i32
    return %arg2, %arg1 : i32, i32
  }
  func.func @transform_2(%arg0: i32, %arg1: i32, %arg2: i32) -> (i32, i32) {
    %c0_i32 = arith.constant 0 : i32
    %c0_i32_0 = arith.constant 0 : i32
    return %c0_i32, %arg1 : i32, i32
  }
  func.func @transform_3(%arg0: i32, %arg1: i32, %arg2: i32) -> (i32, i32) {
    %c0_i32 = arith.constant 0 : i32
    return %arg0, %arg1 : i32, i32
  }
}

module attributes {stable_mosaic.version = 11 : i64} {
  func.func @_fused_linear_kernel(%arg0: i32, %arg1: i32, %arg2: i32, %arg3: memref<16x32xf32, #tpu.memory_space<vmem>>, %arg4: memref<32x32xf32, #tpu.memory_space<vmem>>, %arg5: memref<1x32xf32, #tpu.memory_space<vmem>>, %arg6: memref<16x32xf32, #tpu.memory_space<vmem>>, %arg7: memref<16x32xf32, #tpu.memory_space<vmem>>) attributes {dimension_semantics = [#tpu.dimension_semantics<parallel>, #tpu.dimension_semantics<parallel>, #tpu.dimension_semantics<arbitrary>], iteration_bounds = array<i64: 1, 1, 1>, scalar_prefetch = 0 : i64, scratch_operands = 1 : i64, tpu.core_type = #tpu.core_type<tc>, window_params = [{transform_indices = @transform_0, window_bounds = array<i64: 16, 32>}, {transform_indices = @transform_1, window_bounds = array<i64: 32, 32>}, {transform_indices = @transform_2, window_bounds = array<i64: 1, 32>}, {transform_indices = @transform_3, window_bounds = array<i64: 16, 32>}]} {
    %c0_i32 = arith.constant 0 : i32
    %0 = arith.cmpi eq, %arg2, %c0_i32 : i32
    %1 = arith.extui %0 : i1 to i32
    %c0_i32_0 = arith.constant 0 : i32
    %2 = arith.cmpi ne, %1, %c0_i32_0 : i32
    scf.if %2 {
      %cst_10 = arith.constant 0.000000e+00 : f32
      %12 = vector.broadcast %cst_10 : f32 to vector<16x32xf32>
      %c0_11 = arith.constant 0 : index
      %c0_12 = arith.constant 0 : index
      %13 = vector.load %arg7[%c0_11, %c0_12] : memref<16x32xf32, #tpu.memory_space<vmem>>, vector<16x32xf32>
      tpu.vector_store %arg7[%c0_11, %c0_12], %12 {strides = array<i32>} : memref<16x32xf32, #tpu.memory_space<vmem>>, vector<16x32xf32>,
    } else {
    }
    %c0 = arith.constant 0 : index
    %c0_1 = arith.constant 0 : index
    %3 = vector.load %arg3[%c0, %c0_1] : memref<16x32xf32, #tpu.memory_space<vmem>>, vector<16x32xf32>
    %c0_2 = arith.constant 0 : index
    %c0_3 = arith.constant 0 : index
    %4 = vector.load %arg7[%c0_2, %c0_3] : memref<16x32xf32, #tpu.memory_space<vmem>>, vector<16x32xf32>
    %c0_4 = arith.constant 0 : index
    %c0_5 = arith.constant 0 : index
    %5 = vector.load %arg4[%c0_4, %c0_5] : memref<32x32xf32, #tpu.memory_space<vmem>>, vector<32x32xf32>
    %cst = arith.constant dense<0.000000e+00> : vector<16x32xf32>
    %6 = tpu.matmul %3, %5, %cst {dimension_numbers = #tpu.dot_dimension_numbers<[1], [0], [0], [1], [0, 0, 1, 1], [], []>} : vector<16x32xf32>, vector<32x32xf32>, vector<16x32xf32> -> vector<16x32xf32>
    %7 = arith.addf %4, %6 : vector<16x32xf32>
    %c0_6 = arith.constant 0 : index
    %c0_7 = arith.constant 0 : index
    %8 = vector.load %arg7[%c0_6, %c0_7] : memref<16x32xf32, #tpu.memory_space<vmem>>, vector<16x32xf32>
    tpu.vector_store %arg7[%c0_6, %c0_7], %7 {strides = array<i32>} : memref<16x32xf32, #tpu.memory_space<vmem>>, vector<16x32xf32>,
    %c0_i32_8 = arith.constant 0 : i32
    %9 = arith.cmpi eq, %arg2, %c0_i32_8 : i32
    %10 = arith.extui %9 : i1 to i32
    %c0_i32_9 = arith.constant 0 : i32
    %11 = arith.cmpi ne, %10, %c0_i32_9 : i32
    scf.if %11 {
      %c0_10 = arith.constant 0 : index
      %c0_11 = arith.constant 0 : index
      %12 = vector.load %arg7[%c0_10, %c0_11] : memref<16x32xf32, #tpu.memory_space<vmem>>, vector<16x32xf32>
      %c0_12 = arith.constant 0 : index
      %c0_13 = arith.constant 0 : index
      %13 = vector.load %arg5[%c0_12, %c0_13] : memref<1x32xf32, #tpu.memory_space<vmem>>, vector<1x32xf32>
      %14 = vector.broadcast %13 : vector<1x32xf32> to vector<16x32xf32>
      %15 = arith.addf %12, %14 : vector<16x32xf32>
      %c0_14 = arith.constant 0 : index
      %c0_15 = arith.constant 0 : index
      %16 = vector.load %arg6[%c0_14, %c0_15] : memref<16x32xf32, #tpu.memory_space<vmem>>, vector<16x32xf32>
      tpu.vector_store %arg6[%c0_14, %c0_15], %15 {strides = array<i32>} : memref<16x32xf32, #tpu.memory_space<vmem>>, vector<16x32xf32>,
    } else {
    }
    return
  }
  func.func @transform_0(%arg0: i32, %arg1: i32, %arg2: i32) -> (i32, i32) {
    %c0_i32 = arith.constant 0 : i32
    return %arg0, %arg2 : i32, i32
  }
  func.func @transform_1(%arg0: i32, %arg1: i32, %arg2: i32) -> (i32, i32) {
    %c0_i32 = arith.constant 0 : i32
    return %arg2, %arg1 : i32, i32
  }
  func.func @transform_2(%arg0: i32, %arg1: i32, %arg2: i32) -> (i32, i32) {
    %c0_i32 = arith.constant 0 : i32
    %c0_i32_0 = arith.constant 0 : i32
    return %c0_i32, %arg1 : i32, i32
  }
  func.func @transform_3(%arg0: i32, %arg1: i32, %arg2: i32) -> (i32, i32) {
    %c0_i32 = arith.constant 0 : i32
    return %arg0, %arg1 : i32, i32
  }
}

module attributes {stable_mosaic.version = 11 : i64} {
  func.func @_flash_attention_kernel(%arg0: i32, %arg1: i32, %arg2: i32, %arg3: memref<1x8x32xf32, #tpu.memory_space<vmem>>, %arg4: memref<1x8x32xf32, #tpu.memory_space<vmem>>, %arg5: memref<1x8x32xf32, #tpu.memory_space<vmem>>, %arg6: memref<1x1x8xf32, #tpu.memory_space<vmem>>, %arg7: memref<1x8x32xf32, #tpu.memory_space<vmem>>, %arg8: memref<4x8x1xf32, #tpu.memory_space<vmem>>, %arg9: memref<4x8x1xf32, #tpu.memory_space<vmem>>, %arg10: memref<4x8x8xf32, #tpu.memory_space<vmem>>) attributes {dimension_semantics = [#tpu.dimension_semantics<parallel>, #tpu.dimension_semantics<parallel>, #tpu.dimension_semantics<arbitrary>], iteration_bounds = array<i64: 2, 1, 1>, scalar_prefetch = 0 : i64, scratch_operands = 3 : i64, tpu.core_type = #tpu.core_type<tc>, window_params = [{transform_indices = @transform_0, window_bounds = array<i64: 1, 8, 32>}, {transform_indices = @transform_1, window_bounds = array<i64: 1, 8, 32>}, {transform_indices = @transform_2, window_bounds = array<i64: 1, 8, 32>}, {transform_indices = @transform_3, window_bounds = array<i64: 1, 1, 8>}, {transform_indices = @transform_4, window_bounds = array<i64: 1, 8, 32>}]} {
    %c0_i32 = arith.constant 0 : i32
    %0 = arith.cmpi eq, %arg2, %c0_i32 : i32
    %1 = arith.extui %0 : i1 to i32
    %c0_i32_0 = arith.constant 0 : i32
    %2 = arith.cmpi ne, %1, %c0_i32_0 : i32
    scf.if %2 {
      %cst_131 = arith.constant 0xFF800000 : f32
      %186 = vector.broadcast %cst_131 : f32 to vector<4x8x1xf32>
      %c0_132 = arith.constant 0 : index
      %c0_133 = arith.constant 0 : index
      %c0_134 = arith.constant 0 : index
      %187 = vector.load %arg8[%c0_132, %c0_133, %c0_134] : memref<4x8x1xf32, #tpu.memory_space<vmem>>, vector<4x8x1xf32>
      tpu.vector_store %arg8[%c0_132, %c0_133, %c0_134], %186 {strides = array<i32>} : memref<4x8x1xf32, #tpu.memory_space<vmem>>, vector<4x8x1xf32>,
      %cst_135 = arith.constant 0.000000e+00 : f32
      %188 = vector.broadcast %cst_135 : f32 to vector<4x8x1xf32>
      %c0_136 = arith.constant 0 : index
      %c0_137 = arith.constant 0 : index
      %c0_138 = arith.constant 0 : index
      %189 = vector.load %arg9[%c0_136, %c0_137, %c0_138] : memref<4x8x1xf32, #tpu.memory_space<vmem>>, vector<4x8x1xf32>
      tpu.vector_store %arg9[%c0_136, %c0_137, %c0_138], %188 {strides = array<i32>} : memref<4x8x1xf32, #tpu.memory_space<vmem>>, vector<4x8x1xf32>,
      %cst_139 = arith.constant 0.000000e+00 : f32
      %190 = vector.broadcast %cst_139 : f32 to vector<4x8x8xf32>
      %c0_140 = arith.constant 0 : index
      %c0_141 = arith.constant 0 : index
      %c0_142 = arith.constant 0 : index
      %191 = vector.load %arg10[%c0_140, %c0_141, %c0_142] : memref<4x8x8xf32, #tpu.memory_space<vmem>>, vector<4x8x8xf32>
      tpu.vector_store %arg10[%c0_140, %c0_141, %c0_142], %190 {strides = array<i32>} : memref<4x8x8xf32, #tpu.memory_space<vmem>>, vector<4x8x8xf32>,
    } else {
    }
    %c0 = arith.constant 0 : index
    %c0_1 = arith.constant 0 : index
    %c0_2 = arith.constant 0 : index
    %3 = vector.load %arg6[%c0, %c0_1, %c0_2] : memref<1x1x8xf32, #tpu.memory_space<vmem>>, vector<1x1x8xf32>
    %4 = vector.shape_cast %3 : vector<1x1x8xf32> to vector<1x8xf32>
    %cst = arith.constant 0.000000e+00 : f32
    %5 = vector.broadcast %cst : f32 to vector<1x8xf32>
    %6 = arith.cmpf oeq, %4, %5 : vector<1x8xf32>
    %c0_3 = arith.constant 0 : index
    %c0_4 = arith.constant 0 : index
    %c0_5 = arith.constant 0 : index
    %7 = vector.load %arg3[%c0_3, %c0_4, %c0_5] : memref<1x8x32xf32, #tpu.memory_space<vmem>>, vector<1x8x8xf32>
    %8 = vector.shape_cast %7 : vector<1x8x8xf32> to vector<8x8xf32>
    %cst_6 = arith.constant 0.353553385 : f32
    %9 = vector.broadcast %cst_6 : f32 to vector<8x8xf32>
    %10 = arith.mulf %8, %9 : vector<8x8xf32>
    %c0_7 = arith.constant 0 : index
    %c0_8 = arith.constant 0 : index
    %c0_9 = arith.constant 0 : index
    %11 = vector.load %arg4[%c0_7, %c0_8, %c0_9] : memref<1x8x32xf32, #tpu.memory_space<vmem>>, vector<1x8x8xf32>
    %12 = vector.shape_cast %11 : vector<1x8x8xf32> to vector<8x8xf32>
    %c0_10 = arith.constant 0 : index
    %c0_11 = arith.constant 0 : index
    %c0_12 = arith.constant 0 : index
    %13 = vector.load %arg5[%c0_10, %c0_11, %c0_12] : memref<1x8x32xf32, #tpu.memory_space<vmem>>, vector<1x8x8xf32>
    %14 = vector.shape_cast %13 : vector<1x8x8xf32> to vector<8x8xf32>
    %cst_13 = arith.constant dense<0.000000e+00> : vector<8x8xf32>
    %15 = tpu.matmul %10, %12, %cst_13 {dimension_numbers = #tpu.dot_dimension_numbers<[1], [1], [0], [0], [0, 0, 1, 0], [], []>} : vector<8x8xf32>, vector<8x8xf32>, vector<8x8xf32> -> vector<8x8xf32>
    %cst_14 = arith.constant -1.000000e+09 : f32
    %16 = vector.shape_cast %6 : vector<1x8xi1> to vector<1x8xi1>
    %17 = vector.broadcast %16 : vector<1x8xi1> to vector<8x8xi1>
    %18 = vector.broadcast %cst_14 : f32 to vector<8x8xf32>
    %19 = arith.select %17, %18, %15 : vector<8x8xi1>, vector<8x8xf32>
    %c0_15 = arith.constant 0 : index
    %c0_16 = arith.constant 0 : index
    %c0_17 = arith.constant 0 : index
    %20 = vector.load %arg8[%c0_15, %c0_16, %c0_17] : memref<4x8x1xf32, #tpu.memory_space<vmem>>, vector<1x8x1xf32>
    %21 = vector.shape_cast %20 : vector<1x8x1xf32> to vector<8x1xf32>
    %cst_18 = arith.constant dense<0xFF800000> : vector<8xf32>
    %22 = vector.multi_reduction <maximumf>, %19, %cst_18 [1] : vector<8x8xf32> to vector<8xf32>
    %23 = vector.shape_cast %22 : vector<8xf32> to vector<8x1xf32>
    %24 = arith.maximumf %21, %23 : vector<8x1xf32>
    %25 = arith.subf %21, %24 : vector<8x1xf32>
    %26 = math.exp %25 : vector<8x1xf32>
    %27 = vector.broadcast %24 : vector<8x1xf32> to vector<8x8xf32>
    %28 = arith.subf %19, %27 : vector<8x8xf32>
    %29 = math.exp %28 : vector<8x8xf32>
    %c0_19 = arith.constant 0 : index
    %c0_20 = arith.constant 0 : index
    %c0_21 = arith.constant 0 : index
    %30 = vector.load %arg9[%c0_19, %c0_20, %c0_21] : memref<4x8x1xf32, #tpu.memory_space<vmem>>, vector<1x8x1xf32>
    %31 = vector.shape_cast %30 : vector<1x8x1xf32> to vector<8x1xf32>
    %32 = arith.mulf %26, %31 : vector<8x1xf32>
    %cst_22 = arith.constant dense<0.000000e+00> : vector<8xf32>
    %33 = vector.multi_reduction <add>, %29, %cst_22 [1] : vector<8x8xf32> to vector<8xf32>
    %34 = vector.shape_cast %33 : vector<8xf32> to vector<8x1xf32>
    %35 = arith.addf %32, %34 : vector<8x1xf32>
    %c0_23 = arith.constant 0 : index
    %c0_24 = arith.constant 0 : index
    %c0_25 = arith.constant 0 : index
    %36 = vector.load %arg9[%c0_23, %c0_24, %c0_25] : memref<4x8x1xf32, #tpu.memory_space<vmem>>, vector<1x8x1xf32>
    %37 = vector.shape_cast %36 : vector<1x8x1xf32> to vector<8x1xf32>
    %38 = vector.shape_cast %35 : vector<8x1xf32> to vector<1x8x1xf32>
    tpu.vector_store %arg9[%c0_23, %c0_24, %c0_25], %38 {strides = array<i32>} : memref<4x8x1xf32, #tpu.memory_space<vmem>>, vector<1x8x1xf32>,
    %cst_26 = arith.constant dense<0.000000e+00> : vector<8x8xf32>
    %39 = tpu.matmul %29, %14, %cst_26 {dimension_numbers = #tpu.dot_dimension_numbers<[1], [0], [0], [1], [0, 0, 1, 1], [], []>} : vector<8x8xf32>, vector<8x8xf32>, vector<8x8xf32> -> vector<8x8xf32>
    %c0_27 = arith.constant 0 : index
    %c0_28 = arith.constant 0 : index
    %c0_29 = arith.constant 0 : index
    %40 = vector.load %arg10[%c0_27, %c0_28, %c0_29] : memref<4x8x8xf32, #tpu.memory_space<vmem>>, vector<1x8x8xf32>
    %41 = vector.shape_cast %40 : vector<1x8x8xf32> to vector<8x8xf32>
    %42 = vector.broadcast %26 : vector<8x1xf32> to vector<8x8xf32>
    %43 = arith.mulf %42, %41 : vector<8x8xf32>
    %44 = arith.addf %43, %39 : vector<8x8xf32>
    %c0_30 = arith.constant 0 : index
    %c0_31 = arith.constant 0 : index
    %c0_32 = arith.constant 0 : index
    %45 = vector.load %arg10[%c0_30, %c0_31, %c0_32] : memref<4x8x8xf32, #tpu.memory_space<vmem>>, vector<1x8x8xf32>
    %46 = vector.shape_cast %45 : vector<1x8x8xf32> to vector<8x8xf32>
    %47 = vector.shape_cast %44 : vector<8x8xf32> to vector<1x8x8xf32>
    tpu.vector_store %arg10[%c0_30, %c0_31, %c0_32], %47 {strides = array<i32>} : memref<4x8x8xf32, #tpu.memory_space<vmem>>, vector<1x8x8xf32>,
    %c0_33 = arith.constant 0 : index
    %c0_34 = arith.constant 0 : index
    %c0_35 = arith.constant 0 : index
    %48 = vector.load %arg8[%c0_33, %c0_34, %c0_35] : memref<4x8x1xf32, #tpu.memory_space<vmem>>, vector<1x8x1xf32>
    %49 = vector.shape_cast %48 : vector<1x8x1xf32> to vector<8x1xf32>
    %50 = vector.shape_cast %24 : vector<8x1xf32> to vector<1x8x1xf32>
    tpu.vector_store %arg8[%c0_33, %c0_34, %c0_35], %50 {strides = array<i32>} : memref<4x8x1xf32, #tpu.memory_space<vmem>>, vector<1x8x1xf32>,
    %c0_36 = arith.constant 0 : index
    %c0_37 = arith.constant 0 : index
    %c8 = arith.constant 8 : index
    %51 = vector.load %arg3[%c0_36, %c0_37, %c8] : memref<1x8x32xf32, #tpu.memory_space<vmem>>, vector<1x8x8xf32>
    %52 = vector.shape_cast %51 : vector<1x8x8xf32> to vector<8x8xf32>
    %cst_38 = arith.constant 0.353553385 : f32
    %53 = vector.broadcast %cst_38 : f32 to vector<8x8xf32>
    %54 = arith.mulf %52, %53 : vector<8x8xf32>
    %c0_39 = arith.constant 0 : index
    %c0_40 = arith.constant 0 : index
    %c8_41 = arith.constant 8 : index
    %55 = vector.load %arg4[%c0_39, %c0_40, %c8_41] : memref<1x8x32xf32, #tpu.memory_space<vmem>>, vector<1x8x8xf32>
    %56 = vector.shape_cast %55 : vector<1x8x8xf32> to vector<8x8xf32>
    %c0_42 = arith.constant 0 : index
    %c0_43 = arith.constant 0 : index
    %c8_44 = arith.constant 8 : index
    %57 = vector.load %arg5[%c0_42, %c0_43, %c8_44] : memref<1x8x32xf32, #tpu.memory_space<vmem>>, vector<1x8x8xf32>
    %58 = vector.shape_cast %57 : vector<1x8x8xf32> to vector<8x8xf32>
    %cst_45 = arith.constant dense<0.000000e+00> : vector<8x8xf32>
    %59 = tpu.matmul %54, %56, %cst_45 {dimension_numbers = #tpu.dot_dimension_numbers<[1], [1], [0], [0], [0, 0, 1, 0], [], []>} : vector<8x8xf32>, vector<8x8xf32>, vector<8x8xf32> -> vector<8x8xf32>
    %cst_46 = arith.constant -1.000000e+09 : f32
    %60 = vector.shape_cast %6 : vector<1x8xi1> to vector<1x8xi1>
    %61 = vector.broadcast %60 : vector<1x8xi1> to vector<8x8xi1>
    %62 = vector.broadcast %cst_46 : f32 to vector<8x8xf32>
    %63 = arith.select %61, %62, %59 : vector<8x8xi1>, vector<8x8xf32>
    %c1 = arith.constant 1 : index
    %c0_47 = arith.constant 0 : index
    %c0_48 = arith.constant 0 : index
    %64 = vector.load %arg8[%c1, %c0_47, %c0_48] : memref<4x8x1xf32, #tpu.memory_space<vmem>>, vector<1x8x1xf32>
    %65 = vector.shape_cast %64 : vector<1x8x1xf32> to vector<8x1xf32>
    %cst_49 = arith.constant dense<0xFF800000> : vector<8xf32>
    %66 = vector.multi_reduction <maximumf>, %63, %cst_49 [1] : vector<8x8xf32> to vector<8xf32>
    %67 = vector.shape_cast %66 : vector<8xf32> to vector<8x1xf32>
    %68 = arith.maximumf %65, %67 : vector<8x1xf32>
    %69 = arith.subf %65, %68 : vector<8x1xf32>
    %70 = math.exp %69 : vector<8x1xf32>
    %71 = vector.broadcast %68 : vector<8x1xf32> to vector<8x8xf32>
    %72 = arith.subf %63, %71 : vector<8x8xf32>
    %73 = math.exp %72 : vector<8x8xf32>
    %c1_50 = arith.constant 1 : index
    %c0_51 = arith.constant 0 : index
    %c0_52 = arith.constant 0 : index
    %74 = vector.load %arg9[%c1_50, %c0_51, %c0_52] : memref<4x8x1xf32, #tpu.memory_space<vmem>>, vector<1x8x1xf32>
    %75 = vector.shape_cast %74 : vector<1x8x1xf32> to vector<8x1xf32>
    %76 = arith.mulf %70, %75 : vector<8x1xf32>
    %cst_53 = arith.constant dense<0.000000e+00> : vector<8xf32>
    %77 = vector.multi_reduction <add>, %73, %cst_53 [1] : vector<8x8xf32> to vector<8xf32>
    %78 = vector.shape_cast %77 : vector<8xf32> to vector<8x1xf32>
    %79 = arith.addf %76, %78 : vector<8x1xf32>
    %c1_54 = arith.constant 1 : index
    %c0_55 = arith.constant 0 : index
    %c0_56 = arith.constant 0 : index
    %80 = vector.load %arg9[%c1_54, %c0_55, %c0_56] : memref<4x8x1xf32, #tpu.memory_space<vmem>>, vector<1x8x1xf32>
    %81 = vector.shape_cast %80 : vector<1x8x1xf32> to vector<8x1xf32>
    %82 = vector.shape_cast %79 : vector<8x1xf32> to vector<1x8x1xf32>
    tpu.vector_store %arg9[%c1_54, %c0_55, %c0_56], %82 {strides = array<i32>} : memref<4x8x1xf32, #tpu.memory_space<vmem>>, vector<1x8x1xf32>,
    %cst_57 = arith.constant dense<0.000000e+00> : vector<8x8xf32>
    %83 = tpu.matmul %73, %58, %cst_57 {dimension_numbers = #tpu.dot_dimension_numbers<[1], [0], [0], [1], [0, 0, 1, 1], [], []>} : vector<8x8xf32>, vector<8x8xf32>, vector<8x8xf32> -> vector<8x8xf32>
    %c1_58 = arith.constant 1 : index
    %c0_59 = arith.constant 0 : index
    %c0_60 = arith.constant 0 : index
    %84 = vector.load %arg10[%c1_58, %c0_59, %c0_60] : memref<4x8x8xf32, #tpu.memory_space<vmem>>, vector<1x8x8xf32>
    %85 = vector.shape_cast %84 : vector<1x8x8xf32> to vector<8x8xf32>
    %86 = vector.broadcast %70 : vector<8x1xf32> to vector<8x8xf32>
    %87 = arith.mulf %86, %85 : vector<8x8xf32>
    %88 = arith.addf %87, %83 : vector<8x8xf32>
    %c1_61 = arith.constant 1 : index
    %c0_62 = arith.constant 0 : index
    %c0_63 = arith.constant 0 : index
    %89 = vector.load %arg10[%c1_61, %c0_62, %c0_63] : memref<4x8x8xf32, #tpu.memory_space<vmem>>, vector<1x8x8xf32>
    %90 = vector.shape_cast %89 : vector<1x8x8xf32> to vector<8x8xf32>
    %91 = vector.shape_cast %88 : vector<8x8xf32> to vector<1x8x8xf32>
    tpu.vector_store %arg10[%c1_61, %c0_62, %c0_63], %91 {strides = array<i32>} : memref<4x8x8xf32, #tpu.memory_space<vmem>>, vector<1x8x8xf32>,
    %c1_64 = arith.constant 1 : index
    %c0_65 = arith.constant 0 : index
    %c0_66 = arith.constant 0 : index
    %92 = vector.load %arg8[%c1_64, %c0_65, %c0_66] : memref<4x8x1xf32, #tpu.memory_space<vmem>>, vector<1x8x1xf32>
    %93 = vector.shape_cast %92 : vector<1x8x1xf32> to vector<8x1xf32>
    %94 = vector.shape_cast %68 : vector<8x1xf32> to vector<1x8x1xf32>
    tpu.vector_store %arg8[%c1_64, %c0_65, %c0_66], %94 {strides = array<i32>} : memref<4x8x1xf32, #tpu.memory_space<vmem>>, vector<1x8x1xf32>,
    %c0_67 = arith.constant 0 : index
    %c0_68 = arith.constant 0 : index
    %c16 = arith.constant 16 : index
    %95 = vector.load %arg3[%c0_67, %c0_68, %c16] : memref<1x8x32xf32, #tpu.memory_space<vmem>>, vector<1x8x8xf32>
    %96 = vector.shape_cast %95 : vector<1x8x8xf32> to vector<8x8xf32>
    %cst_69 = arith.constant 0.353553385 : f32
    %97 = vector.broadcast %cst_69 : f32 to vector<8x8xf32>
    %98 = arith.mulf %96, %97 : vector<8x8xf32>
    %c0_70 = arith.constant 0 : index
    %c0_71 = arith.constant 0 : index
    %c16_72 = arith.constant 16 : index
    %99 = vector.load %arg4[%c0_70, %c0_71, %c16_72] : memref<1x8x32xf32, #tpu.memory_space<vmem>>, vector<1x8x8xf32>
    %100 = vector.shape_cast %99 : vector<1x8x8xf32> to vector<8x8xf32>
    %c0_73 = arith.constant 0 : index
    %c0_74 = arith.constant 0 : index
    %c16_75 = arith.constant 16 : index
    %101 = vector.load %arg5[%c0_73, %c0_74, %c16_75] : memref<1x8x32xf32, #tpu.memory_space<vmem>>, vector<1x8x8xf32>
    %102 = vector.shape_cast %101 : vector<1x8x8xf32> to vector<8x8xf32>
    %cst_76 = arith.constant dense<0.000000e+00> : vector<8x8xf32>
    %103 = tpu.matmul %98, %100, %cst_76 {dimension_numbers = #tpu.dot_dimension_numbers<[1], [1], [0], [0], [0, 0, 1, 0], [], []>} : vector<8x8xf32>, vector<8x8xf32>, vector<8x8xf32> -> vector<8x8xf32>
    %cst_77 = arith.constant -1.000000e+09 : f32
    %104 = vector.shape_cast %6 : vector<1x8xi1> to vector<1x8xi1>
    %105 = vector.broadcast %104 : vector<1x8xi1> to vector<8x8xi1>
    %106 = vector.broadcast %cst_77 : f32 to vector<8x8xf32>
    %107 = arith.select %105, %106, %103 : vector<8x8xi1>, vector<8x8xf32>
    %c2 = arith.constant 2 : index
    %c0_78 = arith.constant 0 : index
    %c0_79 = arith.constant 0 : index
    %108 = vector.load %arg8[%c2, %c0_78, %c0_79] : memref<4x8x1xf32, #tpu.memory_space<vmem>>, vector<1x8x1xf32>
    %109 = vector.shape_cast %108 : vector<1x8x1xf32> to vector<8x1xf32>
    %cst_80 = arith.constant dense<0xFF800000> : vector<8xf32>
    %110 = vector.multi_reduction <maximumf>, %107, %cst_80 [1] : vector<8x8xf32> to vector<8xf32>
    %111 = vector.shape_cast %110 : vector<8xf32> to vector<8x1xf32>
    %112 = arith.maximumf %109, %111 : vector<8x1xf32>
    %113 = arith.subf %109, %112 : vector<8x1xf32>
    %114 = math.exp %113 : vector<8x1xf32>
    %115 = vector.broadcast %112 : vector<8x1xf32> to vector<8x8xf32>
    %116 = arith.subf %107, %115 : vector<8x8xf32>
    %117 = math.exp %116 : vector<8x8xf32>
    %c2_81 = arith.constant 2 : index
    %c0_82 = arith.constant 0 : index
    %c0_83 = arith.constant 0 : index
    %118 = vector.load %arg9[%c2_81, %c0_82, %c0_83] : memref<4x8x1xf32, #tpu.memory_space<vmem>>, vector<1x8x1xf32>
    %119 = vector.shape_cast %118 : vector<1x8x1xf32> to vector<8x1xf32>
    %120 = arith.mulf %114, %119 : vector<8x1xf32>
    %cst_84 = arith.constant dense<0.000000e+00> : vector<8xf32>
    %121 = vector.multi_reduction <add>, %117, %cst_84 [1] : vector<8x8xf32> to vector<8xf32>
    %122 = vector.shape_cast %121 : vector<8xf32> to vector<8x1xf32>
    %123 = arith.addf %120, %122 : vector<8x1xf32>
    %c2_85 = arith.constant 2 : index
    %c0_86 = arith.constant 0 : index
    %c0_87 = arith.constant 0 : index
    %124 = vector.load %arg9[%c2_85, %c0_86, %c0_87] : memref<4x8x1xf32, #tpu.memory_space<vmem>>, vector<1x8x1xf32>
    %125 = vector.shape_cast %124 : vector<1x8x1xf32> to vector<8x1xf32>
    %126 = vector.shape_cast %123 : vector<8x1xf32> to vector<1x8x1xf32>
    tpu.vector_store %arg9[%c2_85, %c0_86, %c0_87], %126 {strides = array<i32>} : memref<4x8x1xf32, #tpu.memory_space<vmem>>, vector<1x8x1xf32>,
    %cst_88 = arith.constant dense<0.000000e+00> : vector<8x8xf32>
    %127 = tpu.matmul %117, %102, %cst_88 {dimension_numbers = #tpu.dot_dimension_numbers<[1], [0], [0], [1], [0, 0, 1, 1], [], []>} : vector<8x8xf32>, vector<8x8xf32>, vector<8x8xf32> -> vector<8x8xf32>
    %c2_89 = arith.constant 2 : index
    %c0_90 = arith.constant 0 : index
    %c0_91 = arith.constant 0 : index
    %128 = vector.load %arg10[%c2_89, %c0_90, %c0_91] : memref<4x8x8xf32, #tpu.memory_space<vmem>>, vector<1x8x8xf32>
    %129 = vector.shape_cast %128 : vector<1x8x8xf32> to vector<8x8xf32>
    %130 = vector.broadcast %114 : vector<8x1xf32> to vector<8x8xf32>
    %131 = arith.mulf %130, %129 : vector<8x8xf32>
    %132 = arith.addf %131, %127 : vector<8x8xf32>
    %c2_92 = arith.constant 2 : index
    %c0_93 = arith.constant 0 : index
    %c0_94 = arith.constant 0 : index
    %133 = vector.load %arg10[%c2_92, %c0_93, %c0_94] : memref<4x8x8xf32, #tpu.memory_space<vmem>>, vector<1x8x8xf32>
    %134 = vector.shape_cast %133 : vector<1x8x8xf32> to vector<8x8xf32>
    %135 = vector.shape_cast %132 : vector<8x8xf32> to vector<1x8x8xf32>
    tpu.vector_store %arg10[%c2_92, %c0_93, %c0_94], %135 {strides = array<i32>} : memref<4x8x8xf32, #tpu.memory_space<vmem>>, vector<1x8x8xf32>,
    %c2_95 = arith.constant 2 : index
    %c0_96 = arith.constant 0 : index
    %c0_97 = arith.constant 0 : index
    %136 = vector.load %arg8[%c2_95, %c0_96, %c0_97] : memref<4x8x1xf32, #tpu.memory_space<vmem>>, vector<1x8x1xf32>
    %137 = vector.shape_cast %136 : vector<1x8x1xf32> to vector<8x1xf32>
    %138 = vector.shape_cast %112 : vector<8x1xf32> to vector<1x8x1xf32>
    tpu.vector_store %arg8[%c2_95, %c0_96, %c0_97], %138 {strides = array<i32>} : memref<4x8x1xf32, #tpu.memory_space<vmem>>, vector<1x8x1xf32>,
    %c0_98 = arith.constant 0 : index
    %c0_99 = arith.constant 0 : index
    %c24 = arith.constant 24 : index
    %139 = vector.load %arg3[%c0_98, %c0_99, %c24] : memref<1x8x32xf32, #tpu.memory_space<vmem>>, vector<1x8x8xf32>
    %140 = vector.shape_cast %139 : vector<1x8x8xf32> to vector<8x8xf32>
    %cst_100 = arith.constant 0.353553385 : f32
    %141 = vector.broadcast %cst_100 : f32 to vector<8x8xf32>
    %142 = arith.mulf %140, %141 : vector<8x8xf32>
    %c0_101 = arith.constant 0 : index
    %c0_102 = arith.constant 0 : index
    %c24_103 = arith.constant 24 : index
    %143 = vector.load %arg4[%c0_101, %c0_102, %c24_103] : memref<1x8x32xf32, #tpu.memory_space<vmem>>, vector<1x8x8xf32>
    %144 = vector.shape_cast %143 : vector<1x8x8xf32> to vector<8x8xf32>
    %c0_104 = arith.constant 0 : index
    %c0_105 = arith.constant 0 : index
    %c24_106 = arith.constant 24 : index
    %145 = vector.load %arg5[%c0_104, %c0_105, %c24_106] : memref<1x8x32xf32, #tpu.memory_space<vmem>>, vector<1x8x8xf32>
    %146 = vector.shape_cast %145 : vector<1x8x8xf32> to vector<8x8xf32>
    %cst_107 = arith.constant dense<0.000000e+00> : vector<8x8xf32>
    %147 = tpu.matmul %142, %144, %cst_107 {dimension_numbers = #tpu.dot_dimension_numbers<[1], [1], [0], [0], [0, 0, 1, 0], [], []>} : vector<8x8xf32>, vector<8x8xf32>, vector<8x8xf32> -> vector<8x8xf32>
    %cst_108 = arith.constant -1.000000e+09 : f32
    %148 = vector.shape_cast %6 : vector<1x8xi1> to vector<1x8xi1>
    %149 = vector.broadcast %148 : vector<1x8xi1> to vector<8x8xi1>
    %150 = vector.broadcast %cst_108 : f32 to vector<8x8xf32>
    %151 = arith.select %149, %150, %147 : vector<8x8xi1>, vector<8x8xf32>
    %c3 = arith.constant 3 : index
    %c0_109 = arith.constant 0 : index
    %c0_110 = arith.constant 0 : index
    %152 = vector.load %arg8[%c3, %c0_109, %c0_110] : memref<4x8x1xf32, #tpu.memory_space<vmem>>, vector<1x8x1xf32>
    %153 = vector.shape_cast %152 : vector<1x8x1xf32> to vector<8x1xf32>
    %cst_111 = arith.constant dense<0xFF800000> : vector<8xf32>
    %154 = vector.multi_reduction <maximumf>, %151, %cst_111 [1] : vector<8x8xf32> to vector<8xf32>
    %155 = vector.shape_cast %154 : vector<8xf32> to vector<8x1xf32>
    %156 = arith.maximumf %153, %155 : vector<8x1xf32>
    %157 = arith.subf %153, %156 : vector<8x1xf32>
    %158 = math.exp %157 : vector<8x1xf32>
    %159 = vector.broadcast %156 : vector<8x1xf32> to vector<8x8xf32>
    %160 = arith.subf %151, %159 : vector<8x8xf32>
    %161 = math.exp %160 : vector<8x8xf32>
    %c3_112 = arith.constant 3 : index
    %c0_113 = arith.constant 0 : index
    %c0_114 = arith.constant 0 : index
    %162 = vector.load %arg9[%c3_112, %c0_113, %c0_114] : memref<4x8x1xf32, #tpu.memory_space<vmem>>, vector<1x8x1xf32>
    %163 = vector.shape_cast %162 : vector<1x8x1xf32> to vector<8x1xf32>
    %164 = arith.mulf %158, %163 : vector<8x1xf32>
    %cst_115 = arith.constant dense<0.000000e+00> : vector<8xf32>
    %165 = vector.multi_reduction <add>, %161, %cst_115 [1] : vector<8x8xf32> to vector<8xf32>
    %166 = vector.shape_cast %165 : vector<8xf32> to vector<8x1xf32>
    %167 = arith.addf %164, %166 : vector<8x1xf32>
    %c3_116 = arith.constant 3 : index
    %c0_117 = arith.constant 0 : index
    %c0_118 = arith.constant 0 : index
    %168 = vector.load %arg9[%c3_116, %c0_117, %c0_118] : memref<4x8x1xf32, #tpu.memory_space<vmem>>, vector<1x8x1xf32>
    %169 = vector.shape_cast %168 : vector<1x8x1xf32> to vector<8x1xf32>
    %170 = vector.shape_cast %167 : vector<8x1xf32> to vector<1x8x1xf32>
    tpu.vector_store %arg9[%c3_116, %c0_117, %c0_118], %170 {strides = array<i32>} : memref<4x8x1xf32, #tpu.memory_space<vmem>>, vector<1x8x1xf32>,
    %cst_119 = arith.constant dense<0.000000e+00> : vector<8x8xf32>
    %171 = tpu.matmul %161, %146, %cst_119 {dimension_numbers = #tpu.dot_dimension_numbers<[1], [0], [0], [1], [0, 0, 1, 1], [], []>} : vector<8x8xf32>, vector<8x8xf32>, vector<8x8xf32> -> vector<8x8xf32>
    %c3_120 = arith.constant 3 : index
    %c0_121 = arith.constant 0 : index
    %c0_122 = arith.constant 0 : index
    %172 = vector.load %arg10[%c3_120, %c0_121, %c0_122] : memref<4x8x8xf32, #tpu.memory_space<vmem>>, vector<1x8x8xf32>
    %173 = vector.shape_cast %172 : vector<1x8x8xf32> to vector<8x8xf32>
    %174 = vector.broadcast %158 : vector<8x1xf32> to vector<8x8xf32>
    %175 = arith.mulf %174, %173 : vector<8x8xf32>
    %176 = arith.addf %175, %171 : vector<8x8xf32>
    %c3_123 = arith.constant 3 : index
    %c0_124 = arith.constant 0 : index
    %c0_125 = arith.constant 0 : index
    %177 = vector.load %arg10[%c3_123, %c0_124, %c0_125] : memref<4x8x8xf32, #tpu.memory_space<vmem>>, vector<1x8x8xf32>
    %178 = vector.shape_cast %177 : vector<1x8x8xf32> to vector<8x8xf32>
    %179 = vector.shape_cast %176 : vector<8x8xf32> to vector<1x8x8xf32>
    tpu.vector_store %arg10[%c3_123, %c0_124, %c0_125], %179 {strides = array<i32>} : memref<4x8x8xf32, #tpu.memory_space<vmem>>, vector<1x8x8xf32>,
    %c3_126 = arith.constant 3 : index
    %c0_127 = arith.constant 0 : index
    %c0_128 = arith.constant 0 : index
    %180 = vector.load %arg8[%c3_126, %c0_127, %c0_128] : memref<4x8x1xf32, #tpu.memory_space<vmem>>, vector<1x8x1xf32>
    %181 = vector.shape_cast %180 : vector<1x8x1xf32> to vector<8x1xf32>
    %182 = vector.shape_cast %156 : vector<8x1xf32> to vector<1x8x1xf32>
    tpu.vector_store %arg8[%c3_126, %c0_127, %c0_128], %182 {strides = array<i32>} : memref<4x8x1xf32, #tpu.memory_space<vmem>>, vector<1x8x1xf32>,
    %c0_i32_129 = arith.constant 0 : i32
    %183 = arith.cmpi eq, %arg2, %c0_i32_129 : i32
    %184 = arith.extui %183 : i1 to i32
    %c0_i32_130 = arith.constant 0 : i32
    %185 = arith.cmpi ne, %184, %c0_i32_130 : i32
    scf.if %185 {
      %c0_131 = arith.constant 0 : index
      %c0_132 = arith.constant 0 : index
      %c0_133 = arith.constant 0 : index
      %186 = vector.load %arg9[%c0_131, %c0_132, %c0_133] : memref<4x8x1xf32, #tpu.memory_space<vmem>>, vector<1x8x1xf32>
      %187 = vector.shape_cast %186 : vector<1x8x1xf32> to vector<8x1xf32>
      %188 = tpu.reciprocal %187 : vector<8x1xf32> -> vector<8x1xf32>
      %c0_134 = arith.constant 0 : index
      %c0_135 = arith.constant 0 : index
      %c0_136 = arith.constant 0 : index
      %189 = vector.load %arg10[%c0_134, %c0_135, %c0_136] : memref<4x8x8xf32, #tpu.memory_space<vmem>>, vector<1x8x8xf32>
      %190 = vector.shape_cast %189 : vector<1x8x8xf32> to vector<8x8xf32>
      %191 = vector.broadcast %188 : vector<8x1xf32> to vector<8x8xf32>
      %192 = arith.mulf %190, %191 : vector<8x8xf32>
      %c1_137 = arith.constant 1 : index
      %c0_138 = arith.constant 0 : index
      %c0_139 = arith.constant 0 : index
      %193 = vector.load %arg9[%c1_137, %c0_138, %c0_139] : memref<4x8x1xf32, #tpu.memory_space<vmem>>, vector<1x8x1xf32>
      %194 = vector.shape_cast %193 : vector<1x8x1xf32> to vector<8x1xf32>
      %195 = tpu.reciprocal %194 : vector<8x1xf32> -> vector<8x1xf32>
      %c1_140 = arith.constant 1 : index
      %c0_141 = arith.constant 0 : index
      %c0_142 = arith.constant 0 : index
      %196 = vector.load %arg10[%c1_140, %c0_141, %c0_142] : memref<4x8x8xf32, #tpu.memory_space<vmem>>, vector<1x8x8xf32>
      %197 = vector.shape_cast %196 : vector<1x8x8xf32> to vector<8x8xf32>
      %198 = vector.broadcast %195 : vector<8x1xf32> to vector<8x8xf32>
      %199 = arith.mulf %197, %198 : vector<8x8xf32>
      %c2_143 = arith.constant 2 : index
      %c0_144 = arith.constant 0 : index
      %c0_145 = arith.constant 0 : index
      %200 = vector.load %arg9[%c2_143, %c0_144, %c0_145] : memref<4x8x1xf32, #tpu.memory_space<vmem>>, vector<1x8x1xf32>
      %201 = vector.shape_cast %200 : vector<1x8x1xf32> to vector<8x1xf32>
      %202 = tpu.reciprocal %201 : vector<8x1xf32> -> vector<8x1xf32>
      %c2_146 = arith.constant 2 : index
      %c0_147 = arith.constant 0 : index
      %c0_148 = arith.constant 0 : index
      %203 = vector.load %arg10[%c2_146, %c0_147, %c0_148] : memref<4x8x8xf32, #tpu.memory_space<vmem>>, vector<1x8x8xf32>
      %204 = vector.shape_cast %203 : vector<1x8x8xf32> to vector<8x8xf32>
      %205 = vector.broadcast %202 : vector<8x1xf32> to vector<8x8xf32>
      %206 = arith.mulf %204, %205 : vector<8x8xf32>
      %c3_149 = arith.constant 3 : index
      %c0_150 = arith.constant 0 : index
      %c0_151 = arith.constant 0 : index
      %207 = vector.load %arg9[%c3_149, %c0_150, %c0_151] : memref<4x8x1xf32, #tpu.memory_space<vmem>>, vector<1x8x1xf32>
      %208 = vector.shape_cast %207 : vector<1x8x1xf32> to vector<8x1xf32>
      %209 = tpu.reciprocal %208 : vector<8x1xf32> -> vector<8x1xf32>
      %c3_152 = arith.constant 3 : index
      %c0_153 = arith.constant 0 : index
      %c0_154 = arith.constant 0 : index
      %210 = vector.load %arg10[%c3_152, %c0_153, %c0_154] : memref<4x8x8xf32, #tpu.memory_space<vmem>>, vector<1x8x8xf32>
      %211 = vector.shape_cast %210 : vector<1x8x8xf32> to vector<8x8xf32>
      %212 = vector.broadcast %209 : vector<8x1xf32> to vector<8x8xf32>
      %213 = arith.mulf %211, %212 : vector<8x8xf32>
      %214 = tpu.concatenate %192, %199, %206, %213 in 1 : vector<8x8xf32>, vector<8x8xf32>, vector<8x8xf32>, vector<8x8xf32> -> vector<8x32xf32>
      %c0_155 = arith.constant 0 : index
      %c0_156 = arith.constant 0 : index
      %c0_157 = arith.constant 0 : index
      %215 = vector.load %arg7[%c0_155, %c0_156, %c0_157] : memref<1x8x32xf32, #tpu.memory_space<vmem>>, vector<1x8x32xf32>
      %216 = vector.shape_cast %215 : vector<1x8x32xf32> to vector<8x32xf32>
      %217 = vector.shape_cast %214 : vector<8x32xf32> to vector<1x8x32xf32>
      tpu.vector_store %arg7[%c0_155, %c0_156, %c0_157], %217 {strides = array<i32>} : memref<1x8x32xf32, #tpu.memory_space<vmem>>, vector<1x8x32xf32>,
    } else {
    }
    return
  }
  func.func @transform_0(%arg0: i32, %arg1: i32, %arg2: i32) -> (i32, i32, i32) {
    %c0_i32 = arith.constant 0 : i32
    %c0_i32_0 = arith.constant 0 : i32
    return %arg0, %arg1, %c0_i32 : i32, i32, i32
  }
  func.func @transform_1(%arg0: i32, %arg1: i32, %arg2: i32) -> (i32, i32, i32) {
    %c0_i32 = arith.constant 0 : i32
    %c0_i32_0 = arith.constant 0 : i32
    return %arg0, %arg2, %c0_i32 : i32, i32, i32
  }
  func.func @transform_2(%arg0: i32, %arg1: i32, %arg2: i32) -> (i32, i32, i32) {
    %c0_i32 = arith.constant 0 : i32
    %c0_i32_0 = arith.constant 0 : i32
    return %arg0, %arg2, %c0_i32 : i32, i32, i32
  }
  func.func @transform_3(%arg0: i32, %arg1: i32, %arg2: i32) -> (i32, i32, i32) {
    %c0_i32 = arith.constant 0 : i32
    %c0_i32_0 = arith.constant 0 : i32
    return %arg0, %c0_i32, %arg2 : i32, i32, i32
  }
  func.func @transform_4(%arg0: i32, %arg1: i32, %arg2: i32) -> (i32, i32, i32) {
    %c0_i32 = arith.constant 0 : i32
    %c0_i32_0 = arith.constant 0 : i32
    return %arg0, %arg1, %c0_i32 : i32, i32, i32
  }
}

</mosaic_0001>

<llo_original>
// kernel: _mha_general.9
$region0: #{_mha_general.9}
  #allocation0 [shape = 'u32[]', space=smem, size = 0x4, offset = 0x4, fixed_abs, tag = 'smem constant byte address 0x4 - core index']
  #allocation1 [shape = 'u32[144,128]{1,0:T(1,128)}', space=vmem, size = 0x12000, scoped, tag = 'internal scratch']
  #allocation2 [shape = 'f32[16,32]{1,0:T(8,128)}', space=vmem, size = 0x2000, scoped, tag = 'scratch operand']
  %s0 = inlined_call_operand.vmem [shape: f32[16,32], index: 0, kind: input, shape index: {}]
  %s1 = inlined_call_operand.vmem [shape: f32[32,32], index: 1, kind: input, shape index: {}]
  %s2 = inlined_call_operand.vmem [shape: f32[1,32], index: 2, kind: input, shape index: {}]
  %s3 = inlined_call_operand.hbm [shape: f32[16,32], index: 3, kind: output, shape index: {}]
  %s4 = sld [smem:[#allocation0]]
  $region30: #{_mha_general.9} parent=0
    _
  %s6 = ssub.s32 1, %s4
  %s7 = scalar_select 0, %s6, %s4
  $region1: #{_mha_general.9} parent=0
    #allocation3 [shape = 'u8[8192]{0}', space=vmem, size = 0x2000, scoped, tag = 'output window, operand 0, single buffered']
    #allocation4 [shape = 's32[1]{0}', space=sflag, size = 0x4, scoped, tag = 'scoped memory for _mha_general.9']
    %8 = vsyncpa [#allocation4], 0
    // Predicated region
    $region2: #{_mha_general.9} parent=1 // pred_check
      _
    $region3: #{_mha_general.9} parent=1 // pred_check_branch
      %10 = sbr.rel (0) target = $region5
    $region4: #{_mha_general.9} parent=1 // pred_region
      _
    $region5: #{_mha_general.9} parent=1 // pred_fallthru
      _
    // Predicated region
    $region6: #{_mha_general.9} parent=1 // pred_check
      _
    $region7: #{_mha_general.9} parent=1 // pred_check_branch
      %12 = sbr.rel (0) target = $region9
    $region8: #{_mha_general.9} parent=1 // pred_region
      _
    $region9: #{_mha_general.9} parent=1 // pred_fallthru
      _
    // Predicated region
    $region10: #{_mha_general.9} parent=1 // pred_check
      _
    $region11: #{_mha_general.9} parent=1 // pred_check_branch
      %14 = sbr.rel (0) target = $region13
    $region12: #{_mha_general.9} parent=1 // pred_region
      _
    $region13: #{_mha_general.9} parent=1 // pred_fallthru
      _
    %p15 = scmp.eq.s32.totalorder 0, 0
    // Predicated region
    $region14: #{_mha_general.9} parent=1 // pred_check
      %p16 = pneg %p15
    $region15: #{_mha_general.9} parent=1 // pred_check_branch
      %18 = sbr.rel (%p16) target = $region17
    $region16: #{_mha_general.9} parent=1 // pred_region
      %vm19 = vcmask 261120
      %20 = vst.msk [vmem:[#allocation2] sm:$0xff] %vm19, 0.0
      %21 = vst.msk [vmem:[#allocation2 + $0x8] sm:$0xff] %vm19, 0.0
    $region17: #{_mha_general.9} parent=1 // pred_fallthru
      _
    %v22 = vld [vmem:[%s0] sm:$0xff]
    %v23 = vld [vmem:[%s0 + $0x8] sm:$0xff]
    %v24 = vld [vmem:[#allocation2] sm:$0xff]
    %v25 = vld [vmem:[#allocation2 + $0x8] sm:$0xff]
    %v26 = vld [vmem:[%s1] sm:$0xff]
    %v27 = vld [vmem:[%s1 + $0x8] sm:$0xff]
    %v28 = vld [vmem:[%s1 + $0x10] sm:$0xff]
    %v29 = vld [vmem:[%s1 + $0x18] sm:$0xff]
    %vm30 = vcmask 261120
    %v32 = vsel %vm30, %v22, 0
    %v35 = vsel %vm30, %v23, 0
    %37 = vmatprep.subr.mxu0 0.0
    %38 = vmatpush1.msra.mxu0 %v26
    %39 = vmatprep.subr.mxu0 0.0
    %40 = vmatpush1.msra.mxu0 %v27
    %41 = vmatprep.subr.mxu0 0.0
    %42 = vmatpush1.msra.mxu0 %v28
    %43 = vmatprep.subr.mxu0 0.0
    %44 = vmatpush1.msra.mxu0 %v29
    %45 = vmatprep.subr.mxu0 0.0
    %46 = vmatpush1.msra.mxu0 0.0
    %47 = vmatprep.subr.mxu0 0.0
    %48 = vmatpush1.msra.mxu0 0.0
    %49 = vmatprep.subr.mxu0 0.0
    %50 = vmatpush1.msra.mxu0 0.0
    %51 = vmatprep.subr.mxu0 0.0
    %52 = vmatpush1.msra.mxu0 0.0
    %53 = vmatprep.subr.mxu0 0.0
    %54 = vmatpush1.msra.mxu0 0.0
    %55 = vmatprep.subr.mxu0 0.0
    %56 = vmatpush1.msra.mxu0 0.0
    %57 = vmatprep.subr.mxu0 0.0
    %58 = vmatpush1.msra.mxu0 0.0
    %59 = vmatprep.subr.mxu0 0.0
    %60 = vmatpush1.msra.mxu0 0.0
    %61 = vmatprep.subr.mxu0 0.0
    %62 = vmatpush1.msra.mxu0 0.0
    %63 = vmatprep.subr.mxu0 0.0
    %64 = vmatpush1.msra.mxu0 0.0
    %65 = vmatprep.subr.mxu0 0.0
    %66 = vmatpush1.msra.mxu0 0.0
    %67 = vmatprep.subr.mxu0 0.0
    %68 = vmatpush1.msra.mxu0 0.0
    %69 = vmatprep.subr.mxu0 0.0
    %70 = vmatpush1.msra.mxu0 0.0
    %71 = vmatprep.subr.mxu0 0.0
    %72 = vmatpush1.msra.mxu0 0.0
    %73 = vmatprep.subr.mxu0 0.0
    %74 = vmatpush1.msra.mxu0 0.0
    %75 = vmatprep.subr.mxu0 0.0
    %76 = vmatpush1.msra.mxu0 0.0
    %77 = vmatprep.subr.mxu0 0.0
    %78 = vmatpush1.msra.mxu0 0.0
    %79 = vmatprep.subr.mxu0 0.0
    %80 = vmatpush1.msra.mxu0 0.0
    %81 = vmatprep.subr.mxu0 0.0
    %82 = vmatpush1.msra.mxu0 0.0
    %83 = vmatprep.subr.mxu0 0.0
    %84 = vmatpush1.msra.mxu0 0.0
    %85 = vmatprep.subr.mxu0 0.0
    %86 = vmatpush1.msra.mxu0 0.0
    %87 = vmatprep.subr.mxu0 0.0
    %88 = vmatpush1.msra.mxu0 0.0
    %89 = vmatprep.subr.mxu0 0.0
    %90 = vmatpush1.msra.mxu0 0.0
    %91 = vmatprep.subr.mxu0 0.0
    %92 = vmatpush1.msra.mxu0 0.0
    %93 = vmatprep.subr.mxu0 0.0
    %94 = vmatpush1.msra.mxu0 0.0
    %95 = vmatprep.subr.mxu0 0.0
    %96 = vmatpush1.msra.mxu0 0.0
    %97 = vmatprep.subr.mxu0 0.0
    %98 = vmatpush1.msra.mxu0 0.0
    %99 = vmatprep.subr.mxu0 0.0
    %100 = vmatpush1.msra.mxu0 0.0
    %101 = vmatprep.mubr.f32.mxu0 0.0
    %102 = vmatmul.mubr.f32.gmra.mrb[0].mxu0 %v32
    %v103 = vpop.f32.mrb[0].mxu0
    %v104 = vadd.f32 0.0, %v103
    %v105 = vpop.f32.mrb[0].mxu0
    %106 = vmatprep.mubr.f32.mxu0 0.0
    %107 = vmatmul.mubr.f32.gmra.mrb[0].mxu0 %v35
    %v108 = vpop.f32.mrb[0].mxu0
    %v109 = vadd.f32 0.0, %v108
    %v110 = vpop.f32.mrb[0].mxu0
    %111 = vdwg.mxu0
    %v112 = vadd.f32 %v24, %v104
    %v113 = vadd.f32 %v25, %v109
    %114 = vst.msk [vmem:[#allocation2] sm:$0xff] %vm30, %v112
    %115 = vst.msk [vmem:[#allocation2 + $0x8] sm:$0xff] %vm30, %v113
    // Predicated region
    $region18: #{_mha_general.9} parent=1 // pred_check
      %p116 = pneg %p15
    $region19: #{_mha_general.9} parent=1 // pred_check_branch
      %118 = sbr.rel (%p116) target = $region21
    $region20: #{_mha_general.9} parent=1 // pred_region
      %v119 = vld [vmem:[#allocation2] sm:$0xff]
      %v120 = vld [vmem:[#allocation2 + $0x8] sm:$0xff]
      %v121 = vld [vmem:[%s2] sm:$0x1]
      %v123 = vlaneseq
      %v124 = vshrl.u32 %v123, 7
      %v125 = vsub.s32 0, %v124
      %v126 = vrot.slane %v121, %v125
      %v128 = vadd.f32 %v119, %v126
      %v129 = vadd.f32 %v120, %v126
      %130 = vst.msk [vmem:[#allocation3] sm:$0xff] %vm30, %v128
      %131 = vst.msk [vmem:[#allocation3 + $0x8] sm:$0xff] %vm30, %v129
    $region21: #{_mha_general.9} parent=1 // pred_fallthru
      _
    // Predicated region
    $region22: #{_mha_general.9} parent=1 // pred_check
      _
    $region23: #{_mha_general.9} parent=1 // pred_check_branch
      %133 = sbr.rel (0) target = $region25
    $region24: #{_mha_general.9} parent=1 // pred_region
      %s135 = ssub.s32 256, 256
      %136 = vsyncadd [#allocation4], %s135
      %s137 = sshll.u32 [#allocation3], 4
      %s138 = int_to_ptr.vmem [resolvable:$true] %s137
      %143 = dma.vmem_to_hbm [thread:$0]  %s138, 256, %s3, [#allocation4], 128, 128, 8
    $region25: #{_mha_general.9} parent=1 // pred_fallthru
      _
    // Predicated region
    $region26: #{_mha_general.9} parent=1 // pred_check
      _
    $region27: #{_mha_general.9} parent=1 // pred_check_branch
      %145 = sbr.rel (0) target = $region29
    $region28: #{_mha_general.9} parent=1 // pred_region
      %146 = dma.done [#allocation4], 256
    $region29: #{_mha_general.9} parent=1 // pred_fallthru
      _
    %147 = vsyncpa [#allocation4], 1

// kernel: _mha_general.5
$region0: #{_mha_general.5}
  #allocation0 [shape = 'u32[]', space=smem, size = 0x4, offset = 0x4, fixed_abs, tag = 'smem constant byte address 0x4 - core index']
  #allocation1 [shape = 'u32[144,128]{1,0:T(1,128)}', space=vmem, size = 0x12000, scoped, tag = 'internal scratch']
  #allocation2 [shape = 'f32[16,32]{1,0:T(8,128)}', space=vmem, size = 0x2000, scoped, tag = 'scratch operand']
  %s0 = inlined_call_operand.vmem [shape: f32[16,32], index: 0, kind: input, shape index: {}]
  %s1 = inlined_call_operand.vmem [shape: f32[32,32], index: 1, kind: input, shape index: {}]
  %s2 = inlined_call_operand.vmem [shape: f32[1,32], index: 2, kind: input, shape index: {}]
  %s3 = inlined_call_operand.vmem [shape: f32[16,32], index: 3, kind: output, shape index: {}]
  %s4 = sld [smem:[#allocation0]]
  $region30: #{_mha_general.5} parent=0
    _
  %s6 = ssub.s32 1, %s4
  %s7 = scalar_select 0, %s6, %s4
  // Predicated region
  $region2: #{_mha_general.5} parent=0 // pred_check
    _
  $region3: #{_mha_general.5} parent=0 // pred_check_branch
    %9 = sbr.rel (0) target = $region5
  $region4: #{_mha_general.5} parent=0 // pred_region
    _
  $region5: #{_mha_general.5} parent=0 // pred_fallthru
    _
  // Predicated region
  $region6: #{_mha_general.5} parent=0 // pred_check
    _
  $region7: #{_mha_general.5} parent=0 // pred_check_branch
    %11 = sbr.rel (0) target = $region9
  $region8: #{_mha_general.5} parent=0 // pred_region
    _
  $region9: #{_mha_general.5} parent=0 // pred_fallthru
    _
  // Predicated region
  $region10: #{_mha_general.5} parent=0 // pred_check
    _
  $region11: #{_mha_general.5} parent=0 // pred_check_branch
    %13 = sbr.rel (0) target = $region13
  $region12: #{_mha_general.5} parent=0 // pred_region
    _
  $region13: #{_mha_general.5} parent=0 // pred_fallthru
    _
  %p14 = scmp.eq.s32.totalorder 0, 0
  // Predicated region
  $region14: #{_mha_general.5} parent=0 // pred_check
    %p15 = pneg %p14
  $region15: #{_mha_general.5} parent=0 // pred_check_branch
    %17 = sbr.rel (%p15) target = $region17
  $region16: #{_mha_general.5} parent=0 // pred_region
    %vm18 = vcmask 261120
    %19 = vst.msk [vmem:[#allocation2] sm:$0xff] %vm18, 0.0
    %20 = vst.msk [vmem:[#allocation2 + $0x8] sm:$0xff] %vm18, 0.0
  $region17: #{_mha_general.5} parent=0 // pred_fallthru
    _
  %v21 = vld [vmem:[%s0] sm:$0xff]
  %v22 = vld [vmem:[%s0 + $0x8] sm:$0xff]
  %v23 = vld [vmem:[#allocation2] sm:$0xff]
  %v24 = vld [vmem:[#allocation2 + $0x8] sm:$0xff]
  %v25 = vld [vmem:[%s1] sm:$0xff]
  %v26 = vld [vmem:[%s1 + $0x8] sm:$0xff]
  %v27 = vld [vmem:[%s1 + $0x10] sm:$0xff]
  %v28 = vld [vmem:[%s1 + $0x18] sm:$0xff]
  %vm29 = vcmask 261120
  %v31 = vsel %vm29, %v21, 0
  %v34 = vsel %vm29, %v22, 0
  %36 = vmatprep.subr.mxu0 0.0
  %37 = vmatpush1.msra.mxu0 %v25
  %38 = vmatprep.subr.mxu0 0.0
  %39 = vmatpush1.msra.mxu0 %v26
  %40 = vmatprep.subr.mxu0 0.0
  %41 = vmatpush1.msra.mxu0 %v27
  %42 = vmatprep.subr.mxu0 0.0
  %43 = vmatpush1.msra.mxu0 %v28
  %44 = vmatprep.subr.mxu0 0.0
  %45 = vmatpush1.msra.mxu0 0.0
  %46 = vmatprep.subr.mxu0 0.0
  %47 = vmatpush1.msra.mxu0 0.0
  %48 = vmatprep.subr.mxu0 0.0
  %49 = vmatpush1.msra.mxu0 0.0
  %50 = vmatprep.subr.mxu0 0.0
  %51 = vmatpush1.msra.mxu0 0.0
  %52 = vmatprep.subr.mxu0 0.0
  %53 = vmatpush1.msra.mxu0 0.0
  %54 = vmatprep.subr.mxu0 0.0
  %55 = vmatpush1.msra.mxu0 0.0
  %56 = vmatprep.subr.mxu0 0.0
  %57 = vmatpush1.msra.mxu0 0.0
  %58 = vmatprep.subr.mxu0 0.0
  %59 = vmatpush1.msra.mxu0 0.0
  %60 = vmatprep.subr.mxu0 0.0
  %61 = vmatpush1.msra.mxu0 0.0
  %62 = vmatprep.subr.mxu0 0.0
  %63 = vmatpush1.msra.mxu0 0.0
  %64 = vmatprep.subr.mxu0 0.0
  %65 = vmatpush1.msra.mxu0 0.0
  %66 = vmatprep.subr.mxu0 0.0
  %67 = vmatpush1.msra.mxu0 0.0
  %68 = vmatprep.subr.mxu0 0.0
  %69 = vmatpush1.msra.mxu0 0.0
  %70 = vmatprep.subr.mxu0 0.0
  %71 = vmatpush1.msra.mxu0 0.0
  %72 = vmatprep.subr.mxu0 0.0
  %73 = vmatpush1.msra.mxu0 0.0
  %74 = vmatprep.subr.mxu0 0.0
  %75 = vmatpush1.msra.mxu0 0.0
  %76 = vmatprep.subr.mxu0 0.0
  %77 = vmatpush1.msra.mxu0 0.0
  %78 = vmatprep.subr.mxu0 0.0
  %79 = vmatpush1.msra.mxu0 0.0
  %80 = vmatprep.subr.mxu0 0.0
  %81 = vmatpush1.msra.mxu0 0.0
  %82 = vmatprep.subr.mxu0 0.0
  %83 = vmatpush1.msra.mxu0 0.0
  %84 = vmatprep.subr.mxu0 0.0
  %85 = vmatpush1.msra.mxu0 0.0
  %86 = vmatprep.subr.mxu0 0.0
  %87 = vmatpush1.msra.mxu0 0.0
  %88 = vmatprep.subr.mxu0 0.0
  %89 = vmatpush1.msra.mxu0 0.0
  %90 = vmatprep.subr.mxu0 0.0
  %91 = vmatpush1.msra.mxu0 0.0
  %92 = vmatprep.subr.mxu0 0.0
  %93 = vmatpush1.msra.mxu0 0.0
  %94 = vmatprep.subr.mxu0 0.0
  %95 = vmatpush1.msra.mxu0 0.0
  %96 = vmatprep.subr.mxu0 0.0
  %97 = vmatpush1.msra.mxu0 0.0
  %98 = vmatprep.subr.mxu0 0.0
  %99 = vmatpush1.msra.mxu0 0.0
  %100 = vmatprep.mubr.f32.mxu0 0.0
  %101 = vmatmul.mubr.f32.gmra.mrb[0].mxu0 %v31
  %v102 = vpop.f32.mrb[0].mxu0
  %v103 = vadd.f32 0.0, %v102
  %v104 = vpop.f32.mrb[0].mxu0
  %105 = vmatprep.mubr.f32.mxu0 0.0
  %106 = vmatmul.mubr.f32.gmra.mrb[0].mxu0 %v34
  %v107 = vpop.f32.mrb[0].mxu0
  %v108 = vadd.f32 0.0, %v107
  %v109 = vpop.f32.mrb[0].mxu0
  %110 = vdwg.mxu0
  %v111 = vadd.f32 %v23, %v103
  %v112 = vadd.f32 %v24, %v108
  %113 = vst.msk [vmem:[#allocation2] sm:$0xff] %vm29, %v111
  %114 = vst.msk [vmem:[#allocation2 + $0x8] sm:$0xff] %vm29, %v112
  // Predicated region
  $region18: #{_mha_general.5} parent=0 // pred_check
    %p115 = pneg %p14
  $region19: #{_mha_general.5} parent=0 // pred_check_branch
    %117 = sbr.rel (%p115) target = $region21
  $region20: #{_mha_general.5} parent=0 // pred_region
    %v118 = vld [vmem:[#allocation2] sm:$0xff]
    %v119 = vld [vmem:[#allocation2 + $0x8] sm:$0xff]
    %v120 = vld [vmem:[%s2] sm:$0x1]
    %v122 = vlaneseq
    %v123 = vshrl.u32 %v122, 7
    %v124 = vsub.s32 0, %v123
    %v125 = vrot.slane %v120, %v124
    %v127 = vadd.f32 %v118, %v125
    %v128 = vadd.f32 %v119, %v125
    %129 = vst.msk [vmem:[%s3] sm:$0xff] %vm29, %v127
    %130 = vst.msk [vmem:[%s3 + $0x8] sm:$0xff] %vm29, %v128
  $region21: #{_mha_general.5} parent=0 // pred_fallthru
    _
  // Predicated region
  $region22: #{_mha_general.5} parent=0 // pred_check
    _
  $region23: #{_mha_general.5} parent=0 // pred_check_branch
    %132 = sbr.rel (0) target = $region25
  $region24: #{_mha_general.5} parent=0 // pred_region
    _
  $region25: #{_mha_general.5} parent=0 // pred_fallthru
    _
  // Predicated region
  $region26: #{_mha_general.5} parent=0 // pred_check
    _
  $region27: #{_mha_general.5} parent=0 // pred_check_branch
    %134 = sbr.rel (0) target = $region29
  $region28: #{_mha_general.5} parent=0 // pred_region
    _
  $region29: #{_mha_general.5} parent=0 // pred_fallthru
    _

// kernel: _mha_general.8
$region0: #{_mha_general.8}
  #allocation0 [shape = 'u32[]', space=smem, size = 0x4, offset = 0x4, fixed_abs, tag = 'smem constant byte address 0x4 - core index']
  #allocation1 [shape = 'u32[144,128]{1,0:T(1,128)}', space=vmem, size = 0x12000, scoped, tag = 'internal scratch']
  #allocation2 [shape = 'f32[4,8,1]{2,1,0:T(8,128)}', space=vmem, size = 0x4000, scoped, tag = 'scratch operand']
  #allocation3 [shape = 'f32[4,8,1]{2,1,0:T(8,128)}', space=vmem, size = 0x4000, scoped, tag = 'scratch operand']
  #allocation4 [shape = 'f32[4,8,8]{2,1,0:T(8,128)}', space=vmem, size = 0x4000, scoped, tag = 'scratch operand']
  %s0 = inlined_call_operand.vmem [shape: f32[2,8,32], index: 0, kind: input, shape index: {}]
  %s1 = inlined_call_operand.vmem [shape: f32[2,8,32], index: 1, kind: input, shape index: {}]
  %s2 = inlined_call_operand.vmem [shape: f32[2,8,32], index: 2, kind: input, shape index: {}]
  %s3 = inlined_call_operand.vmem [shape: f32[2,1,8], index: 3, kind: input, shape index: {}]
  %s4 = inlined_call_operand.vmem [shape: f32[2,8,32], index: 4, kind: output, shape index: {}]
  %s5 = sld [smem:[#allocation0]]
  $region57: #{_mha_general.8} parent=0
    _
  %s7 = ssub.s32 1, %s5
  %s8 = scalar_select 0, %s7, %s5
  loop: start=0, step=1, limit=4
  $region2: #{_mha_general.8} parent=0 // loop_pre_header
    _
  $region3: #{_mha_general.8} parent=0 // loop_header
    %s10 = sphi 0, %s14
    %p11 = scmp.ge.s32.totalorder %s10, 4
    %s17 = sphi 0, %s36
    %s18 = sphi 0, %s32
    %s19 = sphi 0, %s28
    %s20 = sphi 0, %s17
    %s21 = sphi 0, %s18
    %s22 = sphi 0, %s19
    %s23 = sphi 0, %s20
    %s24 = sphi 0, %s21
    %s25 = sphi 0, %s22
    %s41 = sphi 0, %s43
    %s44 = sphi 0, %s41
    %s45 = sphi 0, %s44
    %s61 = sphi 0, %s45
    %s69 = sphi 0, %s71
    %s72 = sphi 0, %s69
    %s73 = sphi 0, %s72
    %s89 = sphi 0, %s73
    %s97 = sphi 0, %s99
    %s100 = sphi 0, %s97
    %s101 = sphi 0, %s100
    %s117 = sphi 0, %s101
    %s125 = sphi 0, %s127
    %s128 = sphi 0, %s125
    %s129 = sphi 0, %s128
    %s145 = sphi 0, %s129
    %s153 = sphi 0, %s155
    %s156 = sphi 0, %s153
    %s157 = sphi 0, %s156
    %s173 = sphi 0, %s157
  $region4: #{_mha_general.8} parent=0 // loop_header_branch
    %13 = sbr.rel (%p11) target = $region8
  $region5: #{_mha_general.8} parent=0 // loop_body
    %s15 = ssub.s32 %s10, 1
    %s16 = ssub.s32 %s10, 2
    %s26 = sadd.s32 1, %s19
    %p27 = scmp.ge.s32.totalorder %s26, 1
    %s28 = scalar_select %p27, 0, %s26
    %s29 = sadd.s32 1, %s18
    %s30 = scalar_select %p27, %s29, %s18
    %p31 = scmp.ge.s32.totalorder %s30, 1
    %s32 = scalar_select %p31, 0, %s30
    %s33 = sadd.s32 1, %s17
    %s34 = scalar_select %p31, %s33, %s17
    %p35 = scmp.ge.s32.totalorder %s34, 2
    %s36 = scalar_select %p35, 0, %s34
    %s37 = ssub.s32 %s17, %s36
    %s38 = ssub.s32 %s18, %s32
    %s39 = sor.u32 %s37, %s38
    %p40 = scmp.eq.s32.totalorder %s39, 0
    %s42 = sadd.s32 %s41, 1
    %s43 = scalar_select %p40, %s41, %s42
    %p46 = pneg %p40
    %p47 = scmp.eq.s32.totalorder %s10, 1
    %p48 = por %p46, %p47
    %p49 = scmp.ne.s32.totalorder %s41, %s44
    %p50 = scmp.eq.s32.totalorder %s10, 0
    %p51 = por %p49, %p50
    %p52 = scmp.ne.s32.totalorder %s41, %s44
    %p53 = scmp.eq.s32.totalorder %s15, 1
    %p54 = por %p52, %p53
    %p55 = scmp.ne.s32.totalorder %s44, %s45
    %p56 = scmp.eq.s32.totalorder %s15, 0
    %p57 = por %p55, %p56
    %p58 = scmp.ne.s32.totalorder %s44, %s45
    %p59 = scmp.eq.s32.totalorder %s16, 1
    %p60 = por %p58, %p59
    %p62 = scmp.ne.s32.totalorder %s45, %s61
    %p63 = scmp.eq.s32.totalorder %s16, 0
    %p64 = por %p62, %p63
    %s65 = ssub.s32 %s17, %s36
    %s66 = ssub.s32 %s19, %s28
    %s67 = sor.u32 %s65, %s66
    %p68 = scmp.eq.s32.totalorder %s67, 0
    %s70 = sadd.s32 %s69, 1
    %s71 = scalar_select %p68, %s69, %s70
    %p74 = pneg %p68
    %p75 = scmp.eq.s32.totalorder %s10, 1
    %p76 = por %p74, %p75
    %p77 = scmp.ne.s32.totalorder %s69, %s72
    %p78 = scmp.eq.s32.totalorder %s10, 0
    %p79 = por %p77, %p78
    %p80 = scmp.ne.s32.totalorder %s69, %s72
    %p81 = scmp.eq.s32.totalorder %s15, 1
    %p82 = por %p80, %p81
    %p83 = scmp.ne.s32.totalorder %s72, %s73
    %p84 = scmp.eq.s32.totalorder %s15, 0
    %p85 = por %p83, %p84
    %p86 = scmp.ne.s32.totalorder %s72, %s73
    %p87 = scmp.eq.s32.totalorder %s16, 1
    %p88 = por %p86, %p87
    %p90 = scmp.ne.s32.totalorder %s73, %s89
    %p91 = scmp.eq.s32.totalorder %s16, 0
    %p92 = por %p90, %p91
    %s93 = ssub.s32 %s17, %s36
    %s94 = ssub.s32 %s19, %s28
    %s95 = sor.u32 %s93, %s94
    %p96 = scmp.eq.s32.totalorder %s95, 0
    %s98 = sadd.s32 %s97, 1
    %s99 = scalar_select %p96, %s97, %s98
    %p102 = pneg %p96
    %p103 = scmp.eq.s32.totalorder %s10, 1
    %p104 = por %p102, %p103
    %p105 = scmp.ne.s32.totalorder %s97, %s100
    %p106 = scmp.eq.s32.totalorder %s10, 0
    %p107 = por %p105, %p106
    %p108 = scmp.ne.s32.totalorder %s97, %s100
    %p109 = scmp.eq.s32.totalorder %s15, 1
    %p110 = por %p108, %p109
    %p111 = scmp.ne.s32.totalorder %s100, %s101
    %p112 = scmp.eq.s32.totalorder %s15, 0
    %p113 = por %p111, %p112
    %p114 = scmp.ne.s32.totalorder %s100, %s101
    %p115 = scmp.eq.s32.totalorder %s16, 1
    %p116 = por %p114, %p115
    %p118 = scmp.ne.s32.totalorder %s101, %s117
    %p119 = scmp.eq.s32.totalorder %s16, 0
    %p120 = por %p118, %p119
    %s121 = ssub.s32 %s17, %s36
    %s122 = ssub.s32 %s19, %s28
    %s123 = sor.u32 %s121, %s122
    %p124 = scmp.eq.s32.totalorder %s123, 0
    %s126 = sadd.s32 %s125, 1
    %s127 = scalar_select %p124, %s125, %s126
    %p130 = pneg %p124
    %p131 = scmp.eq.s32.totalorder %s10, 1
    %p132 = por %p130, %p131
    %p133 = scmp.ne.s32.totalorder %s125, %s128
    %p134 = scmp.eq.s32.totalorder %s10, 0
    %p135 = por %p133, %p134
    %p136 = scmp.ne.s32.totalorder %s125, %s128
    %p137 = scmp.eq.s32.totalorder %s15, 1
    %p138 = por %p136, %p137
    %p139 = scmp.ne.s32.totalorder %s128, %s129
    %p140 = scmp.eq.s32.totalorder %s15, 0
    %p141 = por %p139, %p140
    %p142 = scmp.ne.s32.totalorder %s128, %s129
    %p143 = scmp.eq.s32.totalorder %s16, 1
    %p144 = por %p142, %p143
    %p146 = scmp.ne.s32.totalorder %s129, %s145
    %p147 = scmp.eq.s32.totalorder %s16, 0
    %p148 = por %p146, %p147
    %s149 = ssub.s32 %s17, %s36
    %s150 = ssub.s32 %s18, %s32
    %s151 = sor.u32 %s149, %s150
    %p152 = scmp.eq.s32.totalorder %s151, 0
    %s154 = sadd.s32 %s153, 1
    %s155 = scalar_select %p152, %s153, %s154
    %p158 = pneg %p152
    %p159 = scmp.eq.s32.totalorder %s10, 1
    %p160 = por %p158, %p159
    %p161 = scmp.ne.s32.totalorder %s153, %s156
    %p162 = scmp.eq.s32.totalorder %s10, 0
    %p163 = por %p161, %p162
    %p164 = scmp.ne.s32.totalorder %s153, %s156
    %p165 = scmp.eq.s32.totalorder %s15, 1
    %p166 = por %p164, %p165
    %p167 = scmp.ne.s32.totalorder %s156, %s157
    %p168 = scmp.eq.s32.totalorder %s15, 0
    %p169 = por %p167, %p168
    %p170 = scmp.ne.s32.totalorder %s156, %s157
    %p171 = scmp.eq.s32.totalorder %s16, 1
    %p172 = por %p170, %p171
    %p174 = scmp.ne.s32.totalorder %s157, %s173
    %p175 = scmp.eq.s32.totalorder %s16, 0
    %p176 = por %p174, %p175
    %p177 = scmp.le.s32.totalorder 1, %s10
    %p178 = scmp.lt.s32.totalorder %s10, 3
    %p179 = pnand %p177, %p178
    %p180 = pneg %p179
    // Predicated region
    $region9: #{_mha_general.8} parent=5 // pred_check
      _
    $region10: #{_mha_general.8} parent=5 // pred_check_branch
      %182 = sbr.rel (%p179) target = $region12
    $region11: #{_mha_general.8} parent=5 // pred_region
      %s183 = ssub.s32 %s10, 1
    $region12: #{_mha_general.8} parent=5 // pred_fallthru
      _
    %p184 = scmp.lt.s32.totalorder %s10, 2
    // Predicated region
    $region13: #{_mha_general.8} parent=5 // pred_check
      %p185 = pneg %p184
    $region14: #{_mha_general.8} parent=5 // pred_check_branch
      %187 = sbr.rel (%p185) target = $region16
    $region15: #{_mha_general.8} parent=5 // pred_region
      // Predicated region
      $region17: #{_mha_general.8} parent=15 // pred_check
        %p188 = pneg %p51
      $region18: #{_mha_general.8} parent=15 // pred_check_branch
        %190 = sbr.rel (%p188) target = $region20
      $region19: #{_mha_general.8} parent=15 // pred_region
        %p191 = scmp.lt.s32.totalorder %s17, 1
        %s192 = scalar_select %p191, %s17, 1
        %p193 = scmp.lt.s32.totalorder %s18, 0
        %s194 = scalar_select %p193, %s18, 0
        %s195 = sadd.s32 %s194, %s192
        %s196 = smul.addr %s195, 8
        %s197 = scalar_lea.vmem %s0, %s196
      $region20: #{_mha_general.8} parent=15 // pred_fallthru
        _
      // Predicated region
      $region21: #{_mha_general.8} parent=15 // pred_check
        %p198 = pneg %p79
      $region22: #{_mha_general.8} parent=15 // pred_check_branch
        %200 = sbr.rel (%p198) target = $region24
      $region23: #{_mha_general.8} parent=15 // pred_region
        %p201 = scmp.lt.s32.totalorder %s17, 1
        %s202 = scalar_select %p201, %s17, 1
        %p203 = scmp.lt.s32.totalorder %s19, 0
        %s204 = scalar_select %p203, %s19, 0
        %s205 = sadd.s32 %s204, %s202
        %s206 = smul.addr %s205, 8
        %s207 = scalar_lea.vmem %s1, %s206
      $region24: #{_mha_general.8} parent=15 // pred_fallthru
        _
      // Predicated region
      $region25: #{_mha_general.8} parent=15 // pred_check
        %p208 = pneg %p107
      $region26: #{_mha_general.8} parent=15 // pred_check_branch
        %210 = sbr.rel (%p208) target = $region28
      $region27: #{_mha_general.8} parent=15 // pred_region
        %p211 = scmp.lt.s32.totalorder %s17, 1
        %s212 = scalar_select %p211, %s17, 1
        %p213 = scmp.lt.s32.totalorder %s19, 0
        %s214 = scalar_select %p213, %s19, 0
        %s215 = sadd.s32 %s214, %s212
        %s216 = smul.addr %s215, 8
        %s217 = scalar_lea.vmem %s2, %s216
      $region28: #{_mha_general.8} parent=15 // pred_fallthru
        _
      // Predicated region
      $region29: #{_mha_general.8} parent=15 // pred_check
        %p218 = pneg %p135
      $region30: #{_mha_general.8} parent=15 // pred_check_branch
        %220 = sbr.rel (%p218) target = $region32
      $region31: #{_mha_general.8} parent=15 // pred_region
        %p221 = scmp.lt.s32.totalorder %s17, 1
        %s222 = scalar_select %p221, %s17, 1
        %p223 = scmp.lt.s32.totalorder %s19, 0
        %s224 = scalar_select %p223, %s19, 0
        %s225 = sadd.s32 %s224, %s222
        %s226 = scalar_lea.vmem %s3, %s225
      $region32: #{_mha_general.8} parent=15 // pred_fallthru
        _
    $region16: #{_mha_general.8} parent=5 // pred_fallthru
      _
    %p227 = scmp.le.s32.totalorder 1, %s10
    %p228 = scmp.lt.s32.totalorder %s10, 3
    %p229 = pnand %p227, %p228
    %p230 = pneg %p229
    // Predicated region
    $region33: #{_mha_general.8} parent=5 // pred_check
      _
    $region34: #{_mha_general.8} parent=5 // pred_check_branch
      %232 = sbr.rel (%p229) target = $region36
    $region35: #{_mha_general.8} parent=5 // pred_region
      %s233 = ssub.s32 %s10, 1
      %p234 = scmp.lt.s32.totalorder %s20, 1
      %s235 = scalar_select %p234, %s20, 1
      %p236 = scmp.lt.s32.totalorder %s21, 0
      %s237 = scalar_select %p236, %s21, 0
      %s238 = sadd.s32 %s237, %s235
      %s239 = smul.addr %s238, 8
      %s240 = scalar_lea.vmem %s0, %s239
      %p241 = pneg %p57
      %p242 = pneg %p54
      %p243 = scmp.lt.s32.totalorder %s20, 1
      %s244 = scalar_select %p243, %s20, 1
      %p245 = scmp.lt.s32.totalorder %s22, 0
      %s246 = scalar_select %p245, %s22, 0
      %s247 = sadd.s32 %s246, %s244
      %s248 = smul.addr %s247, 8
      %s249 = scalar_lea.vmem %s1, %s248
      %p250 = pneg %p85
      %p251 = pneg %p82
      %p252 = scmp.lt.s32.totalorder %s20, 1
      %s253 = scalar_select %p252, %s20, 1
      %p254 = scmp.lt.s32.totalorder %s22, 0
      %s255 = scalar_select %p254, %s22, 0
      %s256 = sadd.s32 %s255, %s253
      %s257 = smul.addr %s256, 8
      %s258 = scalar_lea.vmem %s2, %s257
      %p259 = pneg %p113
      %p260 = pneg %p110
      %p261 = scmp.lt.s32.totalorder %s20, 1
      %s262 = scalar_select %p261, %s20, 1
      %p263 = scmp.lt.s32.totalorder %s22, 0
      %s264 = scalar_select %p263, %s22, 0
      %s265 = sadd.s32 %s264, %s262
      %s266 = scalar_lea.vmem %s3, %s265
      %p267 = pneg %p141
      %p268 = pneg %p138
      %p269 = pneg %p169
      %p270 = pneg %p166
      %p271 = scmp.lt.s32.totalorder %s20, 1
      %s272 = scalar_select %p271, %s20, 1
      %p273 = scmp.lt.s32.totalorder %s21, 0
      %s274 = scalar_select %p273, %s21, 0
      %s275 = sadd.s32 %s274, %s272
      %s276 = smul.addr %s275, 8
      %s277 = scalar_lea.vmem %s4, %s276
      %p278 = scmp.lt.s32.totalorder %s20, 1
      %s279 = scalar_select %p278, %s20, 1
      %p280 = scmp.lt.s32.totalorder %s21, 0
      %s281 = scalar_select %p280, %s21, 0
      %s282 = sadd.s32 %s281, %s279
      %s283 = smul.addr %s282, 8
      %s284 = scalar_lea.vmem %s0, %s283
      %p285 = scmp.lt.s32.totalorder %s20, 1
      %s286 = scalar_select %p285, %s20, 1
      %p287 = scmp.lt.s32.totalorder %s22, 0
      %s288 = scalar_select %p287, %s22, 0
      %s289 = sadd.s32 %s288, %s286
      %s290 = smul.addr %s289, 8
      %s291 = scalar_lea.vmem %s1, %s290
      %p292 = scmp.lt.s32.totalorder %s20, 1
      %s293 = scalar_select %p292, %s20, 1
      %p294 = scmp.lt.s32.totalorder %s22, 0
      %s295 = scalar_select %p294, %s22, 0
      %s296 = sadd.s32 %s295, %s293
      %s297 = smul.addr %s296, 8
      %s298 = scalar_lea.vmem %s2, %s297
      %p299 = scmp.lt.s32.totalorder %s20, 1
      %s300 = scalar_select %p299, %s20, 1
      %p301 = scmp.lt.s32.totalorder %s22, 0
      %s302 = scalar_select %p301, %s22, 0
      %s303 = sadd.s32 %s302, %s300
      %s304 = scalar_lea.vmem %s3, %s303
      %p305 = scmp.lt.s32.totalorder %s20, 1
      %s306 = scalar_select %p305, %s20, 1
      %p307 = scmp.lt.s32.totalorder %s21, 0
      %s308 = scalar_select %p307, %s21, 0
      %s309 = sadd.s32 %s308, %s306
      %s310 = smul.addr %s309, 8
      %s311 = scalar_lea.vmem %s4, %s310
      %p312 = scmp.eq.s32.totalorder %s22, 0
      // Predicated region
      $region37: #{_mha_general.8} parent=35 // pred_check
        %p313 = pneg %p312
      $region38: #{_mha_general.8} parent=35 // pred_check_branch
        %315 = sbr.rel (%p313) target = $region40
      $region39: #{_mha_general.8} parent=35 // pred_region
        %vm316 = vcmask 7168
        %317 = vst.msk [vmem:[#allocation2] sm:$0xff] %vm316, -inf
        %318 = vst.msk [vmem:[#allocation2 + $0x8] sm:$0xff] %vm316, -inf
        %319 = vst.msk [vmem:[#allocation2 + $0x10] sm:$0xff] %vm316, -inf
        %320 = vst.msk [vmem:[#allocation2 + $0x18] sm:$0xff] %vm316, -inf
        %321 = vst.msk [vmem:[#allocation3] sm:$0xff] %vm316, 0.0
        %322 = vst.msk [vmem:[#allocation3 + $0x8] sm:$0xff] %vm316, 0.0
        %323 = vst.msk [vmem:[#allocation3 + $0x10] sm:$0xff] %vm316, 0.0
        %324 = vst.msk [vmem:[#allocation3 + $0x18] sm:$0xff] %vm316, 0.0
        %vm325 = vcmask 64512
        %326 = vst.msk [vmem:[#allocation4] sm:$0xff] %vm325, 0.0
        %327 = vst.msk [vmem:[#allocation4 + $0x8] sm:$0xff] %vm325, 0.0
        %328 = vst.msk [vmem:[#allocation4 + $0x10] sm:$0xff] %vm325, 0.0
        %329 = vst.msk [vmem:[#allocation4 + $0x18] sm:$0xff] %vm325, 0.0
      $region40: #{_mha_general.8} parent=35 // pred_fallthru
        _
      %v330 = vld [vmem:[%s304] sm:$0x1]
      %vm331 = vcmp.eq.f32.partialorder %v330, 0.0
      %v332 = vld [vmem:[%s284] sm:$0xff]
      %v333 = vmul.f32 %v332, 0.35355338
      %v334 = vld [vmem:[%s291] sm:$0xff]
      %v335 = vld [vmem:[%s298] sm:$0xff]
      %vm336 = vcmask 64512
      %v338 = vsel %vm336, %v333, 0
      %v341 = vsel %vm336, %v334, 0
      %343 = vmatprep.subr.mxu0 0.0
      %344 = vmatpush1.xpose.msra.mxu0 %v341
      %345 = vmatprep.subr.mxu0 0.0
      %346 = vmatpush1.xpose.msra.mxu0 0.0
      %347 = vmatprep.subr.mxu0 0.0
      %348 = vmatpush1.xpose.msra.mxu0 0.0
      %349 = vmatprep.subr.mxu0 0.0
      %350 = vmatpush1.xpose.msra.mxu0 0.0
      %351 = vmatprep.subr.mxu0 0.0
      %352 = vmatpush1.xpose.msra.mxu0 0.0
      %353 = vmatprep.subr.mxu0 0.0
      %354 = vmatpush1.xpose.msra.mxu0 0.0
      %355 = vmatprep.subr.mxu0 0.0
      %356 = vmatpush1.xpose.msra.mxu0 0.0
      %357 = vmatprep.subr.mxu0 0.0
      %358 = vmatpush1.xpose.msra.mxu0 0.0
      %359 = vmatprep.subr.mxu0 0.0
      %360 = vmatpush1.xpose.msra.mxu0 0.0
      %361 = vmatprep.subr.mxu0 0.0
      %362 = vmatpush1.xpose.msra.mxu0 0.0
      %363 = vmatprep.subr.mxu0 0.0
      %364 = vmatpush1.xpose.msra.mxu0 0.0
      %365 = vmatprep.subr.mxu0 0.0
      %366 = vmatpush1.xpose.msra.mxu0 0.0
      %367 = vmatprep.subr.mxu0 0.0
      %368 = vmatpush1.xpose.msra.mxu0 0.0
      %369 = vmatprep.subr.mxu0 0.0
      %370 = vmatpush1.xpose.msra.mxu0 0.0
      %371 = vmatprep.subr.mxu0 0.0
      %372 = vmatpush1.xpose.msra.mxu0 0.0
      %373 = vmatprep.subr.mxu0 0.0
      %374 = vmatpush1.xpose.msra.mxu0 0.0
      %375 = vmatprep.subr.mxu0 0.0
      %376 = vmatpush1.xpose.msra.mxu0 0.0
      %377 = vmatprep.subr.mxu0 0.0
      %378 = vmatpush1.xpose.msra.mxu0 0.0
      %379 = vmatprep.subr.mxu0 0.0
      %380 = vmatpush1.xpose.msra.mxu0 0.0
      %381 = vmatprep.subr.mxu0 0.0
      %382 = vmatpush1.xpose.msra.mxu0 0.0
      %383 = vmatprep.subr.mxu0 0.0
      %384 = vmatpush1.xpose.msra.mxu0 0.0
      %385 = vmatprep.subr.mxu0 0.0
      %386 = vmatpush1.xpose.msra.mxu0 0.0
      %387 = vmatprep.subr.mxu0 0.0
      %388 = vmatpush1.xpose.msra.mxu0 0.0
      %389 = vmatprep.subr.mxu0 0.0
      %390 = vmatpush1.xpose.msra.mxu0 0.0
      %391 = vmatprep.subr.mxu0 0.0
      %392 = vmatpush1.xpose.msra.mxu0 0.0
      %393 = vmatprep.subr.mxu0 0.0
      %394 = vmatpush1.xpose.msra.mxu0 0.0
      %395 = vmatprep.subr.mxu0 0.0
      %396 = vmatpush1.xpose.msra.mxu0 0.0
      %397 = vmatprep.subr.mxu0 0.0
      %398 = vmatpush1.xpose.msra.mxu0 0.0
      %399 = vmatprep.subr.mxu0 0.0
      %400 = vmatpush1.xpose.msra.mxu0 0.0
      %401 = vmatprep.subr.mxu0 0.0
      %402 = vmatpush1.xpose.msra.mxu0 0.0
      %403 = vmatprep.subr.mxu0 0.0
      %404 = vmatpush1.xpose.msra.mxu0 0.0
      %405 = vmatprep.subr.mxu0 0.0
      %406 = vmatpush1.xpose.msra.mxu0 0.0
      %407 = vmatprep.mubr.f32.mxu0 0.0
      %408 = vmatmul.mubr.f32.gmra.mrb[0].mxu0 %v338
      %v409 = vpop.f32.mrb[0].mxu0
      %v410 = vadd.f32 0.0, %v409
      %v411 = vpop.f32.mrb[0].mxu0
      %412 = vdwg.mxu0
      %v413 = vsel %vm331, 1, 0
      %v414 = vlaneseq
      %v415 = vshrl.u32 %v414, 7
      %v416 = vsub.s32 0, %v415
      %v417 = vrot.slane %v413, %v416
      %vm418 = vcmp.eq.s32.totalorder %v417, 1
      %v419 = vsel %vm418, -1e+09, %v410
      %v420 = vld [vmem:[#allocation2] sm:$0xff]
      %v421 = vsel %vm336, %v419, -inf
      %422 = vmax.xlane.f32.xlu0 %v421
      %v423 = vpop.xlane.xlu0 %422
      %v424 = vmax.f32 %v420, %v423
      %v425 = vsub.f32 %v420, %v424
      %v426 = vmul.f32 %v425, 1.442695
      %v427 = vpow.pop %v426
      %429 = vset.pattern.permute.xlu0 0
      %430 = vperm.xlu0 %429, %v424
      %v431 = vpop.permute.xlu0 %430
      %v433 = vsub.f32 %v419, %v431
      %v434 = vmul.f32 %v433, 1.442695
      %v435 = vpow.pop %v434
      %v436 = vld [vmem:[#allocation3] sm:$0xff]
      %v437 = vmul.f32 %v427, %v436
      %v438 = vsel %vm336, %v435, 0.0
      %439 = vadd.xlane.f32.xlu0 %v438
      %v440 = vpop.xlane.xlu0 %439
      %v441 = vadd.f32 %v437, %v440
      %vm442 = vcmask 7168
      %443 = vst.msk [vmem:[#allocation3] sm:$0xff] %vm442, %v441
      %v445 = vsel %vm336, %v435, 0
      %447 = vmatprep.subr.mxu0 0.0
      %448 = vmatpush1.msra.mxu0 %v335
      %449 = vmatprep.subr.mxu0 0.0
      %450 = vmatpush1.msra.mxu0 0.0
      %451 = vmatprep.subr.mxu0 0.0
      %452 = vmatpush1.msra.mxu0 0.0
      %453 = vmatprep.subr.mxu0 0.0
      %454 = vmatpush1.msra.mxu0 0.0
      %455 = vmatprep.subr.mxu0 0.0
      %456 = vmatpush1.msra.mxu0 0.0
      %457 = vmatprep.subr.mxu0 0.0
      %458 = vmatpush1.msra.mxu0 0.0
      %459 = vmatprep.subr.mxu0 0.0
      %460 = vmatpush1.msra.mxu0 0.0
      %461 = vmatprep.subr.mxu0 0.0
      %462 = vmatpush1.msra.mxu0 0.0
      %463 = vmatprep.subr.mxu0 0.0
      %464 = vmatpush1.msra.mxu0 0.0
      %465 = vmatprep.subr.mxu0 0.0
      %466 = vmatpush1.msra.mxu0 0.0
      %467 = vmatprep.subr.mxu0 0.0
      %468 = vmatpush1.msra.mxu0 0.0
      %469 = vmatprep.subr.mxu0 0.0
      %470 = vmatpush1.msra.mxu0 0.0
      %471 = vmatprep.subr.mxu0 0.0
      %472 = vmatpush1.msra.mxu0 0.0
      %473 = vmatprep.subr.mxu0 0.0
      %474 = vmatpush1.msra.mxu0 0.0
      %475 = vmatprep.subr.mxu0 0.0
      %476 = vmatpush1.msra.mxu0 0.0
      %477 = vmatprep.subr.mxu0 0.0
      %478 = vmatpush1.msra.mxu0 0.0
      %479 = vmatprep.subr.mxu0 0.0
      %480 = vmatpush1.msra.mxu0 0.0
      %481 = vmatprep.subr.mxu0 0.0
      %482 = vmatpush1.msra.mxu0 0.0
      %483 = vmatprep.subr.mxu0 0.0
      %484 = vmatpush1.msra.mxu0 0.0
      %485 = vmatprep.subr.mxu0 0.0
      %486 = vmatpush1.msra.mxu0 0.0
      %487 = vmatprep.subr.mxu0 0.0
      %488 = vmatpush1.msra.mxu0 0.0
      %489 = vmatprep.subr.mxu0 0.0
      %490 = vmatpush1.msra.mxu0 0.0
      %491 = vmatprep.subr.mxu0 0.0
      %492 = vmatpush1.msra.mxu0 0.0
      %493 = vmatprep.subr.mxu0 0.0
      %494 = vmatpush1.msra.mxu0 0.0
      %495 = vmatprep.subr.mxu0 0.0
      %496 = vmatpush1.msra.mxu0 0.0
      %497 = vmatprep.subr.mxu0 0.0
      %498 = vmatpush1.msra.mxu0 0.0
      %499 = vmatprep.subr.mxu0 0.0
      %500 = vmatpush1.msra.mxu0 0.0
      %501 = vmatprep.subr.mxu0 0.0
      %502 = vmatpush1.msra.mxu0 0.0
      %503 = vmatprep.subr.mxu0 0.0
      %504 = vmatpush1.msra.mxu0 0.0
      %505 = vmatprep.subr.mxu0 0.0
      %506 = vmatpush1.msra.mxu0 0.0
      %507 = vmatprep.subr.mxu0 0.0
      %508 = vmatpush1.msra.mxu0 0.0
      %509 = vmatprep.subr.mxu0 0.0
      %510 = vmatpush1.msra.mxu0 0.0
      %511 = vmatprep.mubr.f32.mxu0 0.0
      %512 = vmatmul.mubr.f32.gmra.mrb[0].mxu0 %v445
      %v513 = vpop.f32.mrb[0].mxu0
      %v514 = vadd.f32 0.0, %v513
      %v515 = vpop.f32.mrb[0].mxu0
      %516 = vdwg.mxu0
      %v517 = vld [vmem:[#allocation4] sm:$0xff]
      %519 = vset.pattern.permute.xlu0 0
      %520 = vperm.xlu0 %519, %v427
      %v521 = vpop.permute.xlu0 %520
      %v523 = vmul.f32 %v521, %v517
      %v524 = vadd.f32 %v523, %v514
      %525 = vst.msk [vmem:[#allocation4] sm:$0xff] %vm336, %v524
      %526 = vst.msk [vmem:[#allocation2] sm:$0xff] %vm442, %v424
      %v527 = vld [vmem:[%s284] sm:$0xff]
      %v528 = vmul.f32 %v527, 0.35355338
      %v529 = vld [vmem:[%s291] sm:$0xff]
      %v530 = vld [vmem:[%s298] sm:$0xff]
      %532 = vrot.lane.b32.xlu0 %v528, 120
      %v533 = vpop.permute.xlu0 %532
      %535 = vrot.lane.b32.xlu0 %v529, 120
      %v536 = vpop.permute.xlu0 %535
      %v537 = vsel %vm336, %v533, 0
      %v539 = vsel %vm336, %v536, 0
      %541 = vmatprep.subr.mxu0 0.0
      %542 = vmatpush1.xpose.msra.mxu0 %v539
      %543 = vmatprep.subr.mxu0 0.0
      %544 = vmatpush1.xpose.msra.mxu0 0.0
      %545 = vmatprep.subr.mxu0 0.0
      %546 = vmatpush1.xpose.msra.mxu0 0.0
      %547 = vmatprep.subr.mxu0 0.0
      %548 = vmatpush1.xpose.msra.mxu0 0.0
      %549 = vmatprep.subr.mxu0 0.0
      %550 = vmatpush1.xpose.msra.mxu0 0.0
      %551 = vmatprep.subr.mxu0 0.0
      %552 = vmatpush1.xpose.msra.mxu0 0.0
      %553 = vmatprep.subr.mxu0 0.0
      %554 = vmatpush1.xpose.msra.mxu0 0.0
      %555 = vmatprep.subr.mxu0 0.0
      %556 = vmatpush1.xpose.msra.mxu0 0.0
      %557 = vmatprep.subr.mxu0 0.0
      %558 = vmatpush1.xpose.msra.mxu0 0.0
      %559 = vmatprep.subr.mxu0 0.0
      %560 = vmatpush1.xpose.msra.mxu0 0.0
      %561 = vmatprep.subr.mxu0 0.0
      %562 = vmatpush1.xpose.msra.mxu0 0.0
      %563 = vmatprep.subr.mxu0 0.0
      %564 = vmatpush1.xpose.msra.mxu0 0.0
      %565 = vmatprep.subr.mxu0 0.0
      %566 = vmatpush1.xpose.msra.mxu0 0.0
      %567 = vmatprep.subr.mxu0 0.0
      %568 = vmatpush1.xpose.msra.mxu0 0.0
      %569 = vmatprep.subr.mxu0 0.0
      %570 = vmatpush1.xpose.msra.mxu0 0.0
      %571 = vmatprep.subr.mxu0 0.0
      %572 = vmatpush1.xpose.msra.mxu0 0.0
      %573 = vmatprep.subr.mxu0 0.0
      %574 = vmatpush1.xpose.msra.mxu0 0.0
      %575 = vmatprep.subr.mxu0 0.0
      %576 = vmatpush1.xpose.msra.mxu0 0.0
      %577 = vmatprep.subr.mxu0 0.0
      %578 = vmatpush1.xpose.msra.mxu0 0.0
      %579 = vmatprep.subr.mxu0 0.0
      %580 = vmatpush1.xpose.msra.mxu0 0.0
      %581 = vmatprep.subr.mxu0 0.0
      %582 = vmatpush1.xpose.msra.mxu0 0.0
      %583 = vmatprep.subr.mxu0 0.0
      %584 = vmatpush1.xpose.msra.mxu0 0.0
      %585 = vmatprep.subr.mxu0 0.0
      %586 = vmatpush1.xpose.msra.mxu0 0.0
      %587 = vmatprep.subr.mxu0 0.0
      %588 = vmatpush1.xpose.msra.mxu0 0.0
      %589 = vmatprep.subr.mxu0 0.0
      %590 = vmatpush1.xpose.msra.mxu0 0.0
      %591 = vmatprep.subr.mxu0 0.0
      %592 = vmatpush1.xpose.msra.mxu0 0.0
      %593 = vmatprep.subr.mxu0 0.0
      %594 = vmatpush1.xpose.msra.mxu0 0.0
      %595 = vmatprep.subr.mxu0 0.0
      %596 = vmatpush1.xpose.msra.mxu0 0.0
      %597 = vmatprep.subr.mxu0 0.0
      %598 = vmatpush1.xpose.msra.mxu0 0.0
      %599 = vmatprep.subr.mxu0 0.0
      %600 = vmatpush1.xpose.msra.mxu0 0.0
      %601 = vmatprep.subr.mxu0 0.0
      %602 = vmatpush1.xpose.msra.mxu0 0.0
      %603 = vmatprep.subr.mxu0 0.0
      %604 = vmatpush1.xpose.msra.mxu0 0.0
      %605 = vmatprep.mubr.f32.mxu0 0.0
      %606 = vmatmul.mubr.f32.gmra.mrb[0].mxu0 %v537
      %v607 = vpop.f32.mrb[0].mxu0
      %v608 = vadd.f32 0.0, %v607
      %v609 = vpop.f32.mrb[0].mxu0
      %610 = vdwg.mxu0
      %v611 = vsel %vm418, -1e+09, %v608
      %s612 = scalar_lea.vmem [#allocation2], 8
      %v613 = vld [vmem:[%s612] sm:$0xff]
      %v614 = vsel %vm336, %v611, -inf
      %615 = vmax.xlane.f32.xlu0 %v614
      %v616 = vpop.xlane.xlu0 %615
      %v617 = vmax.f32 %v613, %v616
      %v618 = vsub.f32 %v613, %v617
      %v619 = vmul.f32 %v618, 1.442695
      %v620 = vpow.pop %v619
      %622 = vset.pattern.permute.xlu0 0
      %623 = vperm.xlu0 %622, %v617
      %v624 = vpop.permute.xlu0 %623
      %v626 = vsub.f32 %v611, %v624
      %v627 = vmul.f32 %v626, 1.442695
      %v628 = vpow.pop %v627
      %s629 = scalar_lea.vmem [#allocation3], 8
      %v630 = vld [vmem:[%s629] sm:$0xff]
      %v631 = vmul.f32 %v620, %v630
      %v632 = vsel %vm336, %v628, 0.0
      %633 = vadd.xlane.f32.xlu0 %v632
      %v634 = vpop.xlane.xlu0 %633
      %v635 = vadd.f32 %v631, %v634
      %636 = vst.msk [vmem:[%s629] sm:$0xff] %vm442, %v635
      %638 = vrot.lane.b32.xlu0 %v530, 120
      %v639 = vpop.permute.xlu0 %638
      %v642 = vsel %vm336, %v628, 0
      %644 = vmatprep.subr.mxu0 0.0
      %645 = vmatpush1.msra.mxu0 %v639
      %646 = vmatprep.subr.mxu0 0.0
      %647 = vmatpush1.msra.mxu0 0.0
      %648 = vmatprep.subr.mxu0 0.0
      %649 = vmatpush1.msra.mxu0 0.0
      %650 = vmatprep.subr.mxu0 0.0
      %651 = vmatpush1.msra.mxu0 0.0
      %652 = vmatprep.subr.mxu0 0.0
      %653 = vmatpush1.msra.mxu0 0.0
      %654 = vmatprep.subr.mxu0 0.0
      %655 = vmatpush1.msra.mxu0 0.0
      %656 = vmatprep.subr.mxu0 0.0
      %657 = vmatpush1.msra.mxu0 0.0
      %658 = vmatprep.subr.mxu0 0.0
      %659 = vmatpush1.msra.mxu0 0.0
      %660 = vmatprep.subr.mxu0 0.0
      %661 = vmatpush1.msra.mxu0 0.0
      %662 = vmatprep.subr.mxu0 0.0
      %663 = vmatpush1.msra.mxu0 0.0
      %664 = vmatprep.subr.mxu0 0.0
      %665 = vmatpush1.msra.mxu0 0.0
      %666 = vmatprep.subr.mxu0 0.0
      %667 = vmatpush1.msra.mxu0 0.0
      %668 = vmatprep.subr.mxu0 0.0
      %669 = vmatpush1.msra.mxu0 0.0
      %670 = vmatprep.subr.mxu0 0.0
      %671 = vmatpush1.msra.mxu0 0.0
      %672 = vmatprep.subr.mxu0 0.0
      %673 = vmatpush1.msra.mxu0 0.0
      %674 = vmatprep.subr.mxu0 0.0
      %675 = vmatpush1.msra.mxu0 0.0
      %676 = vmatprep.subr.mxu0 0.0
      %677 = vmatpush1.msra.mxu0 0.0
      %678 = vmatprep.subr.mxu0 0.0
      %679 = vmatpush1.msra.mxu0 0.0
      %680 = vmatprep.subr.mxu0 0.0
      %681 = vmatpush1.msra.mxu0 0.0
      %682 = vmatprep.subr.mxu0 0.0
      %683 = vmatpush1.msra.mxu0 0.0
      %684 = vmatprep.subr.mxu0 0.0
      %685 = vmatpush1.msra.mxu0 0.0
      %686 = vmatprep.subr.mxu0 0.0
      %687 = vmatpush1.msra.mxu0 0.0
      %688 = vmatprep.subr.mxu0 0.0
      %689 = vmatpush1.msra.mxu0 0.0
      %690 = vmatprep.subr.mxu0 0.0
      %691 = vmatpush1.msra.mxu0 0.0
      %692 = vmatprep.subr.mxu0 0.0
      %693 = vmatpush1.msra.mxu0 0.0
      %694 = vmatprep.subr.mxu0 0.0
      %695 = vmatpush1.msra.mxu0 0.0
      %696 = vmatprep.subr.mxu0 0.0
      %697 = vmatpush1.msra.mxu0 0.0
      %698 = vmatprep.subr.mxu0 0.0
      %699 = vmatpush1.msra.mxu0 0.0
      %700 = vmatprep.subr.mxu0 0.0
      %701 = vmatpush1.msra.mxu0 0.0
      %702 = vmatprep.subr.mxu0 0.0
      %703 = vmatpush1.msra.mxu0 0.0
      %704 = vmatprep.subr.mxu0 0.0
      %705 = vmatpush1.msra.mxu0 0.0
      %706 = vmatprep.subr.mxu0 0.0
      %707 = vmatpush1.msra.mxu0 0.0
      %708 = vmatprep.mubr.f32.mxu0 0.0
      %709 = vmatmul.mubr.f32.gmra.mrb[0].mxu0 %v642
      %v710 = vpop.f32.mrb[0].mxu0
      %v711 = vadd.f32 0.0, %v710
      %v712 = vpop.f32.mrb[0].mxu0
      %713 = vdwg.mxu0
      %s714 = scalar_lea.vmem [#allocation4], 8
      %v715 = vld [vmem:[%s714] sm:$0xff]
      %717 = vset.pattern.permute.xlu0 0
      %718 = vperm.xlu0 %717, %v620
      %v719 = vpop.permute.xlu0 %718
      %v721 = vmul.f32 %v719, %v715
      %v722 = vadd.f32 %v721, %v711
      %723 = vst.msk [vmem:[%s714] sm:$0xff] %vm336, %v722
      %724 = vst.msk [vmem:[%s612] sm:$0xff] %vm442, %v617
      %v725 = vld [vmem:[%s284] sm:$0xff]
      %v726 = vmul.f32 %v725, 0.35355338
      %v727 = vld [vmem:[%s291] sm:$0xff]
      %v728 = vld [vmem:[%s298] sm:$0xff]
      %730 = vrot.lane.b32.xlu0 %v726, 112
      %v731 = vpop.permute.xlu0 %730
      %733 = vrot.lane.b32.xlu0 %v727, 112
      %v734 = vpop.permute.xlu0 %733
      %v735 = vsel %vm336, %v731, 0
      %v737 = vsel %vm336, %v734, 0
      %739 = vmatprep.subr.mxu0 0.0
      %740 = vmatpush1.xpose.msra.mxu0 %v737
      %741 = vmatprep.subr.mxu0 0.0
      %742 = vmatpush1.xpose.msra.mxu0 0.0
      %743 = vmatprep.subr.mxu0 0.0
      %744 = vmatpush1.xpose.msra.mxu0 0.0
      %745 = vmatprep.subr.mxu0 0.0
      %746 = vmatpush1.xpose.msra.mxu0 0.0
      %747 = vmatprep.subr.mxu0 0.0
      %748 = vmatpush1.xpose.msra.mxu0 0.0
      %749 = vmatprep.subr.mxu0 0.0
      %750 = vmatpush1.xpose.msra.mxu0 0.0
      %751 = vmatprep.subr.mxu0 0.0
      %752 = vmatpush1.xpose.msra.mxu0 0.0
      %753 = vmatprep.subr.mxu0 0.0
      %754 = vmatpush1.xpose.msra.mxu0 0.0
      %755 = vmatprep.subr.mxu0 0.0
      %756 = vmatpush1.xpose.msra.mxu0 0.0
      %757 = vmatprep.subr.mxu0 0.0
      %758 = vmatpush1.xpose.msra.mxu0 0.0
      %759 = vmatprep.subr.mxu0 0.0
      %760 = vmatpush1.xpose.msra.mxu0 0.0
      %761 = vmatprep.subr.mxu0 0.0
      %762 = vmatpush1.xpose.msra.mxu0 0.0
      %763 = vmatprep.subr.mxu0 0.0
      %764 = vmatpush1.xpose.msra.mxu0 0.0
      %765 = vmatprep.subr.mxu0 0.0
      %766 = vmatpush1.xpose.msra.mxu0 0.0
      %767 = vmatprep.subr.mxu0 0.0
      %768 = vmatpush1.xpose.msra.mxu0 0.0
      %769 = vmatprep.subr.mxu0 0.0
      %770 = vmatpush1.xpose.msra.mxu0 0.0
      %771 = vmatprep.subr.mxu0 0.0
      %772 = vmatpush1.xpose.msra.mxu0 0.0
      %773 = vmatprep.subr.mxu0 0.0
      %774 = vmatpush1.xpose.msra.mxu0 0.0
      %775 = vmatprep.subr.mxu0 0.0
      %776 = vmatpush1.xpose.msra.mxu0 0.0
      %777 = vmatprep.subr.mxu0 0.0
      %778 = vmatpush1.xpose.msra.mxu0 0.0
      %779 = vmatprep.subr.mxu0 0.0
      %780 = vmatpush1.xpose.msra.mxu0 0.0
      %781 = vmatprep.subr.mxu0 0.0
      %782 = vmatpush1.xpose.msra.mxu0 0.0
      %783 = vmatprep.subr.mxu0 0.0
      %784 = vmatpush1.xpose.msra.mxu0 0.0
      %785 = vmatprep.subr.mxu0 0.0
      %786 = vmatpush1.xpose.msra.mxu0 0.0
      %787 = vmatprep.subr.mxu0 0.0
      %788 = vmatpush1.xpose.msra.mxu0 0.0
      %789 = vmatprep.subr.mxu0 0.0
      %790 = vmatpush1.xpose.msra.mxu0 0.0
      %791 = vmatprep.subr.mxu0 0.0
      %792 = vmatpush1.xpose.msra.mxu0 0.0
      %793 = vmatprep.subr.mxu0 0.0
      %794 = vmatpush1.xpose.msra.mxu0 0.0
      %795 = vmatprep.subr.mxu0 0.0
      %796 = vmatpush1.xpose.msra.mxu0 0.0
      %797 = vmatprep.subr.mxu0 0.0
      %798 = vmatpush1.xpose.msra.mxu0 0.0
      %799 = vmatprep.subr.mxu0 0.0
      %800 = vmatpush1.xpose.msra.mxu0 0.0
      %801 = vmatprep.subr.mxu0 0.0
      %802 = vmatpush1.xpose.msra.mxu0 0.0
      %803 = vmatprep.mubr.f32.mxu0 0.0
      %804 = vmatmul.mubr.f32.gmra.mrb[0].mxu0 %v735
      %v805 = vpop.f32.mrb[0].mxu0
      %v806 = vadd.f32 0.0, %v805
      %v807 = vpop.f32.mrb[0].mxu0
      %808 = vdwg.mxu0
      %v809 = vsel %vm418, -1e+09, %v806
      %s810 = scalar_lea.vmem [#allocation2], 16
      %v811 = vld [vmem:[%s810] sm:$0xff]
      %v812 = vsel %vm336, %v809, -inf
      %813 = vmax.xlane.f32.xlu0 %v812
      %v814 = vpop.xlane.xlu0 %813
      %v815 = vmax.f32 %v811, %v814
      %v816 = vsub.f32 %v811, %v815
      %v817 = vmul.f32 %v816, 1.442695
      %v818 = vpow.pop %v817
      %820 = vset.pattern.permute.xlu0 0
      %821 = vperm.xlu0 %820, %v815
      %v822 = vpop.permute.xlu0 %821
      %v824 = vsub.f32 %v809, %v822
      %v825 = vmul.f32 %v824, 1.442695
      %v826 = vpow.pop %v825
      %s827 = scalar_lea.vmem [#allocation3], 16
      %v828 = vld [vmem:[%s827] sm:$0xff]
      %v829 = vmul.f32 %v818, %v828
      %v830 = vsel %vm336, %v826, 0.0
      %831 = vadd.xlane.f32.xlu0 %v830
      %v832 = vpop.xlane.xlu0 %831
      %v833 = vadd.f32 %v829, %v832
      %834 = vst.msk [vmem:[%s827] sm:$0xff] %vm442, %v833
      %836 = vrot.lane.b32.xlu0 %v728, 112
      %v837 = vpop.permute.xlu0 %836
      %v840 = vsel %vm336, %v826, 0
      %842 = vmatprep.subr.mxu0 0.0
      %843 = vmatpush1.msra.mxu0 %v837
      %844 = vmatprep.subr.mxu0 0.0
      %845 = vmatpush1.msra.mxu0 0.0
      %846 = vmatprep.subr.mxu0 0.0
      %847 = vmatpush1.msra.mxu0 0.0
      %848 = vmatprep.subr.mxu0 0.0
      %849 = vmatpush1.msra.mxu0 0.0
      %850 = vmatprep.subr.mxu0 0.0
      %851 = vmatpush1.msra.mxu0 0.0
      %852 = vmatprep.subr.mxu0 0.0
      %853 = vmatpush1.msra.mxu0 0.0
      %854 = vmatprep.subr.mxu0 0.0
      %855 = vmatpush1.msra.mxu0 0.0
      %856 = vmatprep.subr.mxu0 0.0
      %857 = vmatpush1.msra.mxu0 0.0
      %858 = vmatprep.subr.mxu0 0.0
      %859 = vmatpush1.msra.mxu0 0.0
      %860 = vmatprep.subr.mxu0 0.0
      %861 = vmatpush1.msra.mxu0 0.0
      %862 = vmatprep.subr.mxu0 0.0
      %863 = vmatpush1.msra.mxu0 0.0
      %864 = vmatprep.subr.mxu0 0.0
      %865 = vmatpush1.msra.mxu0 0.0
      %866 = vmatprep.subr.mxu0 0.0
      %867 = vmatpush1.msra.mxu0 0.0
      %868 = vmatprep.subr.mxu0 0.0
      %869 = vmatpush1.msra.mxu0 0.0
      %870 = vmatprep.subr.mxu0 0.0
      %871 = vmatpush1.msra.mxu0 0.0
      %872 = vmatprep.subr.mxu0 0.0
      %873 = vmatpush1.msra.mxu0 0.0
      %874 = vmatprep.subr.mxu0 0.0
      %875 = vmatpush1.msra.mxu0 0.0
      %876 = vmatprep.subr.mxu0 0.0
      %877 = vmatpush1.msra.mxu0 0.0
      %878 = vmatprep.subr.mxu0 0.0
      %879 = vmatpush1.msra.mxu0 0.0
      %880 = vmatprep.subr.mxu0 0.0
      %881 = vmatpush1.msra.mxu0 0.0
      %882 = vmatprep.subr.mxu0 0.0
      %883 = vmatpush1.msra.mxu0 0.0
      %884 = vmatprep.subr.mxu0 0.0
      %885 = vmatpush1.msra.mxu0 0.0
      %886 = vmatprep.subr.mxu0 0.0
      %887 = vmatpush1.msra.mxu0 0.0
      %888 = vmatprep.subr.mxu0 0.0
      %889 = vmatpush1.msra.mxu0 0.0
      %890 = vmatprep.subr.mxu0 0.0
      %891 = vmatpush1.msra.mxu0 0.0
      %892 = vmatprep.subr.mxu0 0.0
      %893 = vmatpush1.msra.mxu0 0.0
      %894 = vmatprep.subr.mxu0 0.0
      %895 = vmatpush1.msra.mxu0 0.0
      %896 = vmatprep.subr.mxu0 0.0
      %897 = vmatpush1.msra.mxu0 0.0
      %898 = vmatprep.subr.mxu0 0.0
      %899 = vmatpush1.msra.mxu0 0.0
      %900 = vmatprep.subr.mxu0 0.0
      %901 = vmatpush1.msra.mxu0 0.0
      %902 = vmatprep.subr.mxu0 0.0
      %903 = vmatpush1.msra.mxu0 0.0
      %904 = vmatprep.subr.mxu0 0.0
      %905 = vmatpush1.msra.mxu0 0.0
      %906 = vmatprep.mubr.f32.mxu0 0.0
      %907 = vmatmul.mubr.f32.gmra.mrb[0].mxu0 %v840
      %v908 = vpop.f32.mrb[0].mxu0
      %v909 = vadd.f32 0.0, %v908
      %v910 = vpop.f32.mrb[0].mxu0
      %911 = vdwg.mxu0
      %s912 = scalar_lea.vmem [#allocation4], 16
      %v913 = vld [vmem:[%s912] sm:$0xff]
      %915 = vset.pattern.permute.xlu0 0
      %916 = vperm.xlu0 %915, %v818
      %v917 = vpop.permute.xlu0 %916
      %v919 = vmul.f32 %v917, %v913
      %v920 = vadd.f32 %v919, %v909
      %921 = vst.msk [vmem:[%s912] sm:$0xff] %vm336, %v920
      %922 = vst.msk [vmem:[%s810] sm:$0xff] %vm442, %v815
      %v923 = vld [vmem:[%s284] sm:$0xff]
      %v924 = vmul.f32 %v923, 0.35355338
      %v925 = vld [vmem:[%s291] sm:$0xff]
      %v926 = vld [vmem:[%s298] sm:$0xff]
      %928 = vrot.lane.b32.xlu0 %v924, 104
      %v929 = vpop.permute.xlu0 %928
      %931 = vrot.lane.b32.xlu0 %v925, 104
      %v932 = vpop.permute.xlu0 %931
      %v933 = vsel %vm336, %v929, 0
      %v935 = vsel %vm336, %v932, 0
      %937 = vmatprep.subr.mxu0 0.0
      %938 = vmatpush1.xpose.msra.mxu0 %v935
      %939 = vmatprep.subr.mxu0 0.0
      %940 = vmatpush1.xpose.msra.mxu0 0.0
      %941 = vmatprep.subr.mxu0 0.0
      %942 = vmatpush1.xpose.msra.mxu0 0.0
      %943 = vmatprep.subr.mxu0 0.0
      %944 = vmatpush1.xpose.msra.mxu0 0.0
      %945 = vmatprep.subr.mxu0 0.0
      %946 = vmatpush1.xpose.msra.mxu0 0.0
      %947 = vmatprep.subr.mxu0 0.0
      %948 = vmatpush1.xpose.msra.mxu0 0.0
      %949 = vmatprep.subr.mxu0 0.0
      %950 = vmatpush1.xpose.msra.mxu0 0.0
      %951 = vmatprep.subr.mxu0 0.0
      %952 = vmatpush1.xpose.msra.mxu0 0.0
      %953 = vmatprep.subr.mxu0 0.0
      %954 = vmatpush1.xpose.msra.mxu0 0.0
      %955 = vmatprep.subr.mxu0 0.0
      %956 = vmatpush1.xpose.msra.mxu0 0.0
      %957 = vmatprep.subr.mxu0 0.0
      %958 = vmatpush1.xpose.msra.mxu0 0.0
      %959 = vmatprep.subr.mxu0 0.0
      %960 = vmatpush1.xpose.msra.mxu0 0.0
      %961 = vmatprep.subr.mxu0 0.0
      %962 = vmatpush1.xpose.msra.mxu0 0.0
      %963 = vmatprep.subr.mxu0 0.0
      %964 = vmatpush1.xpose.msra.mxu0 0.0
      %965 = vmatprep.subr.mxu0 0.0
      %966 = vmatpush1.xpose.msra.mxu0 0.0
      %967 = vmatprep.subr.mxu0 0.0
      %968 = vmatpush1.xpose.msra.mxu0 0.0
      %969 = vmatprep.subr.mxu0 0.0
      %970 = vmatpush1.xpose.msra.mxu0 0.0
      %971 = vmatprep.subr.mxu0 0.0
      %972 = vmatpush1.xpose.msra.mxu0 0.0
      %973 = vmatprep.subr.mxu0 0.0
      %974 = vmatpush1.xpose.msra.mxu0 0.0
      %975 = vmatprep.subr.mxu0 0.0
      %976 = vmatpush1.xpose.msra.mxu0 0.0
      %977 = vmatprep.subr.mxu0 0.0
      %978 = vmatpush1.xpose.msra.mxu0 0.0
      %979 = vmatprep.subr.mxu0 0.0
      %980 = vmatpush1.xpose.msra.mxu0 0.0
      %981 = vmatprep.subr.mxu0 0.0
      %982 = vmatpush1.xpose.msra.mxu0 0.0
      %983 = vmatprep.subr.mxu0 0.0
      %984 = vmatpush1.xpose.msra.mxu0 0.0
      %985 = vmatprep.subr.mxu0 0.0
      %986 = vmatpush1.xpose.msra.mxu0 0.0
      %987 = vmatprep.subr.mxu0 0.0
      %988 = vmatpush1.xpose.msra.mxu0 0.0
      %989 = vmatprep.subr.mxu0 0.0
      %990 = vmatpush1.xpose.msra.mxu0 0.0
      %991 = vmatprep.subr.mxu0 0.0
      %992 = vmatpush1.xpose.msra.mxu0 0.0
      %993 = vmatprep.subr.mxu0 0.0
      %994 = vmatpush1.xpose.msra.mxu0 0.0
      %995 = vmatprep.subr.mxu0 0.0
      %996 = vmatpush1.xpose.msra.mxu0 0.0
      %997 = vmatprep.subr.mxu0 0.0
      %998 = vmatpush1.xpose.msra.mxu0 0.0
      %999 = vmatprep.subr.mxu0 0.0
      %1000 = vmatpush1.xpose.msra.mxu0 0.0
      %1001 = vmatprep.mubr.f32.mxu0 0.0
      %1002 = vmatmul.mubr.f32.gmra.mrb[0].mxu0 %v933
      %v1003 = vpop.f32.mrb[0].mxu0
      %v1004 = vadd.f32 0.0, %v1003
      %v1005 = vpop.f32.mrb[0].mxu0
      %1006 = vdwg.mxu0
      %v1007 = vsel %vm418, -1e+09, %v1004
      %s1008 = scalar_lea.vmem [#allocation2], 24
      %v1009 = vld [vmem:[%s1008] sm:$0xff]
      %v1010 = vsel %vm336, %v1007, -inf
      %1011 = vmax.xlane.f32.xlu0 %v1010
      %v1012 = vpop.xlane.xlu0 %1011
      %v1013 = vmax.f32 %v1009, %v1012
      %v1014 = vsub.f32 %v1009, %v1013
      %v1015 = vmul.f32 %v1014, 1.442695
      %v1016 = vpow.pop %v1015
      %1018 = vset.pattern.permute.xlu0 0
      %1019 = vperm.xlu0 %1018, %v1013
      %v1020 = vpop.permute.xlu0 %1019
      %v1022 = vsub.f32 %v1007, %v1020
      %v1023 = vmul.f32 %v1022, 1.442695
      %v1024 = vpow.pop %v1023
      %s1025 = scalar_lea.vmem [#allocation3], 24
      %v1026 = vld [vmem:[%s1025] sm:$0xff]
      %v1027 = vmul.f32 %v1016, %v1026
      %v1028 = vsel %vm336, %v1024, 0.0
      %1029 = vadd.xlane.f32.xlu0 %v1028
      %v1030 = vpop.xlane.xlu0 %1029
      %v1031 = vadd.f32 %v1027, %v1030
      %1032 = vst.msk [vmem:[%s1025] sm:$0xff] %vm442, %v1031
      %1034 = vrot.lane.b32.xlu0 %v926, 104
      %v1035 = vpop.permute.xlu0 %1034
      %v1038 = vsel %vm336, %v1024, 0
      %1040 = vmatprep.subr.mxu0 0.0
      %1041 = vmatpush1.msra.mxu0 %v1035
      %1042 = vmatprep.subr.mxu0 0.0
      %1043 = vmatpush1.msra.mxu0 0.0
      %1044 = vmatprep.subr.mxu0 0.0
      %1045 = vmatpush1.msra.mxu0 0.0
      %1046 = vmatprep.subr.mxu0 0.0
      %1047 = vmatpush1.msra.mxu0 0.0
      %1048 = vmatprep.subr.mxu0 0.0
      %1049 = vmatpush1.msra.mxu0 0.0
      %1050 = vmatprep.subr.mxu0 0.0
      %1051 = vmatpush1.msra.mxu0 0.0
      %1052 = vmatprep.subr.mxu0 0.0
      %1053 = vmatpush1.msra.mxu0 0.0
      %1054 = vmatprep.subr.mxu0 0.0
      %1055 = vmatpush1.msra.mxu0 0.0
      %1056 = vmatprep.subr.mxu0 0.0
      %1057 = vmatpush1.msra.mxu0 0.0
      %1058 = vmatprep.subr.mxu0 0.0
      %1059 = vmatpush1.msra.mxu0 0.0
      %1060 = vmatprep.subr.mxu0 0.0
      %1061 = vmatpush1.msra.mxu0 0.0
      %1062 = vmatprep.subr.mxu0 0.0
      %1063 = vmatpush1.msra.mxu0 0.0
      %1064 = vmatprep.subr.mxu0 0.0
      %1065 = vmatpush1.msra.mxu0 0.0
      %1066 = vmatprep.subr.mxu0 0.0
      %1067 = vmatpush1.msra.mxu0 0.0
      %1068 = vmatprep.subr.mxu0 0.0
      %1069 = vmatpush1.msra.mxu0 0.0
      %1070 = vmatprep.subr.mxu0 0.0
      %1071 = vmatpush1.msra.mxu0 0.0
      %1072 = vmatprep.subr.mxu0 0.0
      %1073 = vmatpush1.msra.mxu0 0.0
      %1074 = vmatprep.subr.mxu0 0.0
      %1075 = vmatpush1.msra.mxu0 0.0
      %1076 = vmatprep.subr.mxu0 0.0
      %1077 = vmatpush1.msra.mxu0 0.0
      %1078 = vmatprep.subr.mxu0 0.0
      %1079 = vmatpush1.msra.mxu0 0.0
      %1080 = vmatprep.subr.mxu0 0.0
      %1081 = vmatpush1.msra.mxu0 0.0
      %1082 = vmatprep.subr.mxu0 0.0
      %1083 = vmatpush1.msra.mxu0 0.0
      %1084 = vmatprep.subr.mxu0 0.0
      %1085 = vmatpush1.msra.mxu0 0.0
      %1086 = vmatprep.subr.mxu0 0.0
      %1087 = vmatpush1.msra.mxu0 0.0
      %1088 = vmatprep.subr.mxu0 0.0
      %1089 = vmatpush1.msra.mxu0 0.0
      %1090 = vmatprep.subr.mxu0 0.0
      %1091 = vmatpush1.msra.mxu0 0.0
      %1092 = vmatprep.subr.mxu0 0.0
      %1093 = vmatpush1.msra.mxu0 0.0
      %1094 = vmatprep.subr.mxu0 0.0
      %1095 = vmatpush1.msra.mxu0 0.0
      %1096 = vmatprep.subr.mxu0 0.0
      %1097 = vmatpush1.msra.mxu0 0.0
      %1098 = vmatprep.subr.mxu0 0.0
      %1099 = vmatpush1.msra.mxu0 0.0
      %1100 = vmatprep.subr.mxu0 0.0
      %1101 = vmatpush1.msra.mxu0 0.0
      %1102 = vmatprep.subr.mxu0 0.0
      %1103 = vmatpush1.msra.mxu0 0.0
      %1104 = vmatprep.mubr.f32.mxu0 0.0
      %1105 = vmatmul.mubr.f32.gmra.mrb[0].mxu0 %v1038
      %v1106 = vpop.f32.mrb[0].mxu0
      %v1107 = vadd.f32 0.0, %v1106
      %v1108 = vpop.f32.mrb[0].mxu0
      %1109 = vdwg.mxu0
      %s1110 = scalar_lea.vmem [#allocation4], 24
      %v1111 = vld [vmem:[%s1110] sm:$0xff]
      %1113 = vset.pattern.permute.xlu0 0
      %1114 = vperm.xlu0 %1113, %v1016
      %v1115 = vpop.permute.xlu0 %1114
      %v1117 = vmul.f32 %v1115, %v1111
      %v1118 = vadd.f32 %v1117, %v1107
      %1119 = vst.msk [vmem:[%s1110] sm:$0xff] %vm336, %v1118
      %1120 = vst.msk [vmem:[%s1008] sm:$0xff] %vm442, %v1013
      // Predicated region
      $region41: #{_mha_general.8} parent=35 // pred_check
        %p1121 = pneg %p312
      $region42: #{_mha_general.8} parent=35 // pred_check_branch
        %1123 = sbr.rel (%p1121) target = $region44
      $region43: #{_mha_general.8} parent=35 // pred_region
        %v1124 = vld [vmem:[#allocation3] sm:$0xff]
        %v1125 = vrcp.pop %v1124
        %v1126 = vld [vmem:[#allocation4] sm:$0xff]
        %1128 = vset.pattern.permute.xlu0 0
        %1129 = vperm.xlu0 %1128, %v1125
        %v1130 = vpop.permute.xlu0 %1129
        %v1132 = vmul.f32 %v1126, %v1130
        %v1133 = vld [vmem:[%s629] sm:$0xff]
        %v1134 = vrcp.pop %v1133
        %v1135 = vld [vmem:[%s714] sm:$0xff]
        %1137 = vset.pattern.permute.xlu0 0
        %1138 = vperm.xlu0 %1137, %v1134
        %v1139 = vpop.permute.xlu0 %1138
        %v1141 = vmul.f32 %v1135, %v1139
        %v1142 = vld [vmem:[%s827] sm:$0xff]
        %v1143 = vrcp.pop %v1142
        %v1144 = vld [vmem:[%s912] sm:$0xff]
        %1146 = vset.pattern.permute.xlu0 0
        %1147 = vperm.xlu0 %1146, %v1143
        %v1148 = vpop.permute.xlu0 %1147
        %v1150 = vmul.f32 %v1144, %v1148
        %v1151 = vld [vmem:[%s1025] sm:$0xff]
        %v1152 = vrcp.pop %v1151
        %v1153 = vld [vmem:[%s1110] sm:$0xff]
        %1155 = vset.pattern.permute.xlu0 0
        %1156 = vperm.xlu0 %1155, %v1152
        %v1157 = vpop.permute.xlu0 %1156
        %v1159 = vmul.f32 %v1153, %v1157
        %1161 = vrot.lane.b32.xlu0 %v1141, 8
        %v1162 = vpop.permute.xlu0 %1161
        %1165 = vrot.lane.b32.xlu0 %v1150, 16
        %v1166 = vpop.permute.xlu0 %1165
        %1169 = vrot.lane.b32.xlu0 %v1159, 24
        %v1170 = vpop.permute.xlu0 %1169
        %v1172 = vsel %vm336, %v1132, %v1162
        %vm1173 = vcmask 130048
        %v1174 = vsel %vm1173, %v1172, %v1166
        %vm1175 = vcmask 195584
        %v1176 = vsel %vm1175, %v1174, %v1170
        %vm1177 = vcmask 261120
        %1178 = vst.msk [vmem:[%s311] sm:$0xff] %vm1177, %v1176
      $region44: #{_mha_general.8} parent=35 // pred_fallthru
        _
      %p1179 = scmp.lt.s32.totalorder %s20, 1
      %s1180 = scalar_select %p1179, %s20, 1
      %p1181 = scmp.lt.s32.totalorder %s21, 0
      %s1182 = scalar_select %p1181, %s21, 0
      %s1183 = sadd.s32 %s1182, %s1180
      %s1184 = smul.addr %s1183, 8
      %s1185 = scalar_lea.vmem %s4, %s1184
      // Predicated region
      $region45: #{_mha_general.8} parent=35 // pred_check
        %p1186 = pneg %p166
      $region46: #{_mha_general.8} parent=35 // pred_check_branch
        %1188 = sbr.rel (%p1186) target = $region48
      $region47: #{_mha_general.8} parent=35 // pred_region
        _
      $region48: #{_mha_general.8} parent=35 // pred_fallthru
        _
    $region36: #{_mha_general.8} parent=5 // pred_fallthru
      _
    %p1189 = scmp.le.s32.totalorder 2, %s10
    // Predicated region
    $region49: #{_mha_general.8} parent=5 // pred_check
      %p1190 = pneg %p1189
    $region50: #{_mha_general.8} parent=5 // pred_check_branch
      %1192 = sbr.rel (%p1190) target = $region52
    $region51: #{_mha_general.8} parent=5 // pred_region
      %s1193 = ssub.s32 %s10, 2
      // Predicated region
      $region53: #{_mha_general.8} parent=51 // pred_check
        %p1194 = pneg %p172
      $region54: #{_mha_general.8} parent=51 // pred_check_branch
        %1196 = sbr.rel (%p1194) target = $region56
      $region55: #{_mha_general.8} parent=51 // pred_region
        %p1197 = scmp.lt.s32.totalorder %s23, 1
        %s1198 = scalar_select %p1197, %s23, 1
        %p1199 = scmp.lt.s32.totalorder %s24, 0
        %s1200 = scalar_select %p1199, %s24, 0
        %s1201 = sadd.s32 %s1200, %s1198
        %s1202 = smul.addr %s1201, 8
        %s1203 = scalar_lea.vmem %s4, %s1202
      $region56: #{_mha_general.8} parent=51 // pred_fallthru
        _
    $region52: #{_mha_general.8} parent=5 // pred_fallthru
      _
  $region6: #{_mha_general.8} parent=0 // loop_footer
    %s14 = sadd.s32 1, %s10
  $region7: #{_mha_general.8} parent=0 // loop_footer_branch
    %9 = sbr.rel target = $region3
  $region8: #{_mha_general.8} parent=0 // loop_exit
    _

</llo_original>
